<compile_context>
chip_gen: v7x
topology: tpu7x:2x2x1
jax: 0.10.0
libtpu: 0.0.40
codegen_flags: <defaults>
</compile_context>

<pallas_src>
import math

import jax
import jax.numpy as jnp
from jax.experimental import pallas as pl
from jax.experimental.pallas import tpu as pltpu


def _round_up(x, m):
    return ((x + m - 1) // m) * m


def _make_attention_kernel(cell_chunk):
    def kernel(mem_ref, mask_ref, q_ref, wh_ref, ws_ref, v_ref,
               weights_ref, context_ref, logits_ref):
        # Resident (constant-block) parameters.
        wh = wh_ref[...]                       # (Dm, Da)
        ws = ws_ref[...]                       # (Dq, Da)
        vrow = v_ref[...][:, 0]                # (Da,)

        C = mem_ref.shape[1]
        Dm = mem_ref.shape[2]
        Da = wh.shape[1]

        # St * Ws : (TB, Da)
        tq = jnp.dot(q_ref[...], ws, preferred_element_type=jnp.float32)

        def chunk_logits(start, size):
            mem_c = mem_ref[:, pl.ds(start, size), :]            # (TB, size, Dm)
            tb = mem_c.shape[0]
            # Hi * Wh on the MXU (flatten batch*cells -> clean 2-D matmul)
            mh = jnp.dot(mem_c.reshape(tb * size, Dm), wh,
                         preferred_element_type=jnp.float32).reshape(tb, size, Da)
            e = jnp.tanh(mh + tq[:, None, :])                    # (TB, size, Da)
            return jnp.sum(e * vrow[None, None, :], axis=-1)     # (TB, size)

        n_chunks = C // cell_chunk
        if n_chunks == 1:
            raw_logits = chunk_logits(0, C)
        else:
            # Bound the live tanh intermediate: write logits per cell chunk.
            def body(ci, carry):
                start = pl.multiple_of(ci * cell_chunk, cell_chunk)
                logits_ref[:, pl.ds(start, cell_chunk)] = chunk_logits(start, cell_chunk)
                return carry
            jax.lax.fori_loop(0, n_chunks, body, 0)
            raw_logits = logits_ref[...]

        # --- masking (matches _mask_logits) ---
        mask = mask_ref[...]
        no_cells = jnp.sum(mask, axis=1, keepdims=True) == 0.0   # (TB, 1) bool
        suppress = jnp.where(mask == 0.0, -jnp.inf, 0.0)
        suppress = jnp.where(no_cells, 0.0, suppress)            # rows w/ no cells: untouched
        logits_masked = raw_logits + suppress

        # softmax over cells (dim=1)
        m = jnp.max(logits_masked, axis=1, keepdims=True)
        ex = jnp.exp(logits_masked - m)
        w = ex * pl.reciprocal(jnp.sum(ex, axis=1, keepdims=True), approx=True)
        w = jnp.where(no_cells, 0.0, w)                          # _mask_weights

        # context = weights @ memory_values  (batched MXU matmul, same as torch bmm)
        ctx = jnp.einsum('bqc,bcd->bqd', w[:, None, :], mem_ref[...],
                         preferred_element_type=jnp.float32)[:, 0, :]

        weights_ref[...] = w
        context_ref[...] = ctx
        logits_ref[...] = logits_masked

    return kernel


def attention_forward(memory_values, memory_mask, query, wh, ws, v):
    B, C, Dm = memory_values.shape
    Dq = query.shape[1]
    Da = wh.shape[1]

    # --- cell chunk for the tanh intermediate ---
    cell_chunk = C
    for cand in (512, 256, 128):
        if C > cand and C % cand == 0:
            cell_chunk = cand
            break

    # --- batch tile: largest multiple of 8 (<=128) whose working set fits the budget
    # (double-buffered memory_values block + live tanh chunk); conservative for v7x 64 MiB.
    budget = 24 * 1024 * 1024
    TB = 128
    while TB > 8 and 4 * (2 * TB * C * Dm + 2 * TB * cell_chunk * Da) > budget:
        TB //= 2
    TB = min(TB, _round_up(B, 8))
    B_pad = _round_up(B, TB)

    if B_pad != B:
        pad = B_pad - B
        memory_values = jnp.pad(memory_values, ((0, pad), (0, 0), (0, 0)))
        memory_mask = jnp.pad(memory_mask, ((0, pad), (0, 0)))
        query = jnp.pad(query, ((0, pad), (0, 0)))

    block_bytes = 4 * (TB * C * Dm + 2 * TB * C + TB * Dq + Dm * Da + Dq * Da
                       + Da + TB * Dm + TB * C + TB * cell_chunk * Da)
    vmem_limit = int(min(64 * 1024 * 1024, max(4 * block_bytes, 16 * 1024 * 1024)))

    grid = (B_pad // TB,)
    kernel = _make_attention_kernel(cell_chunk)

    weights, context, logits = pl.pallas_call(
        kernel,
        out_shape=(
            jax.ShapeDtypeStruct((B_pad, C), jnp.float32),    # weights
            jax.ShapeDtypeStruct((B_pad, Dm), jnp.float32),   # context
            jax.ShapeDtypeStruct((B_pad, C), jnp.float32),    # logits (masked)
        ),
        grid=grid,
        in_specs=[
            pl.BlockSpec((TB, C, Dm), lambda i: (i, 0, 0)),   # memory_values: streamed
            pl.BlockSpec((TB, C), lambda i: (i, 0)),          # mask
            pl.BlockSpec((TB, Dq), lambda i: (i, 0)),         # query
            pl.BlockSpec((Dm, Da), lambda i: (0, 0)),         # Wh: VMEM-resident
            pl.BlockSpec((Dq, Da), lambda i: (0, 0)),         # Ws: VMEM-resident
            pl.BlockSpec((Da, 1), lambda i: (0, 0)),          # v : VMEM-resident
        ],
        out_specs=(
            pl.BlockSpec((TB, C), lambda i: (i, 0)),
            pl.BlockSpec((TB, Dm), lambda i: (i, 0)),
            pl.BlockSpec((TB, C), lambda i: (i, 0)),
        ),
        compiler_params=pltpu.CompilerParams(
            dimension_semantics=("parallel",),                # 2 TCs on v7x; harmless on v5e/v6e
            vmem_limit_bytes=vmem_limit,
        ),
    )(memory_values, memory_mask, query, wh, ws, v)

    if B_pad != B:
        weights, context, logits = weights[:B], context[:B], logits[:B]
    return weights, context, logits


def _attention_reference(mem, mask, q, wh, ws, v):
    """Pure-JAX reference mirroring the torch module."""
    tq = q @ ws
    e = jnp.tanh(jnp.einsum('bcd,da->bca', mem, wh) + tq[:, None, :])
    logits = jnp.einsum('bca,a->bc', e, v[:, 0])
    no_cells = jnp.sum(mask, axis=1, keepdims=True) == 0.0
    suppress = jnp.where(mask == 0.0, -jnp.inf, 0.0)
    suppress = jnp.where(no_cells, 0.0, suppress)
    logits = logits + suppress
    w = jax.nn.softmax(logits, axis=1)
    w = jnp.where(no_cells, 0.0, w)
    ctx = jnp.einsum('bc,bcd->bd', w, mem)
    return w, ctx, logits


def init_weight_matrix(key, in_dim, out_dim):
    stdv = 1.0 / math.sqrt(in_dim)
    return jax.random.uniform(key, (in_dim, out_dim), jnp.float32,
                              minval=-stdv, maxval=stdv)


if __name__ == "__main__":
    batch = 2
    num_cells = 8
    memory_dim = 16
    query_dim = 12
    attn_dim = 32

    key = jax.random.PRNGKey(0)
    k_wh, k_ws, k_v, k_mem, k_q = jax.random.split(key, 5)

    # deterministic parameter init (mirrors _initialize_weight_matrix shapes)
    Wh = init_weight_matrix(k_wh, memory_dim, attn_dim)   # memory_transform
    Ws = init_weight_matrix(k_ws, query_dim, attn_dim)    # query_transform
    Vt = init_weight_matrix(k_v, attn_dim, 1)             # v_transform

    memory_values = jax.random.normal(k_mem, (batch, num_cells, memory_dim), jnp.float32)
    query = jax.random.normal(k_q, (batch, query_dim), jnp.float32)

    # mask: row 0 fully valid, row 1 only first 3 cells valid
    memory_mask = jnp.stack([
        jnp.ones((num_cells,), jnp.float32),
        jnp.concatenate([jnp.ones((3,), jnp.float32),
                         jnp.zeros((num_cells - 3,), jnp.float32)]),
    ], axis=0)

    weights, context, logits = attention_forward(memory_values, memory_mask, query, Wh, Ws, Vt)
    jax.block_until_ready((weights, context, logits))

    # correctness check vs pure-JAX reference (handles -inf positions explicitly)
    w_ref, c_ref, l_ref = _attention_reference(memory_values, memory_mask, query, Wh, Ws, Vt)
    finite = jnp.isfinite(l_ref)
    assert bool(jnp.all(finite == jnp.isfinite(logits)))
    assert bool(jnp.allclose(jnp.where(finite, logits, 0.0),
                             jnp.where(finite, l_ref, 0.0), rtol=2e-3, atol=2e-3))
    assert bool(jnp.allclose(weights, w_ref, rtol=2e-3, atol=2e-3))
    assert bool(jnp.allclose(context, c_ref, rtol=2e-3, atol=2e-3))

    print("KERNEL_OK")
</pallas_src>

<mosaic_0001>
module attributes {stable_mosaic.version = 11 : i64} {
  func.func @kernel(%arg0: i32, %arg1: memref<8x8x16xf32, #tpu.memory_space<vmem>>, %arg2: memref<8x8xf32, #tpu.memory_space<vmem>>, %arg3: memref<8x12xf32, #tpu.memory_space<vmem>>, %arg4: memref<16x32xf32, #tpu.memory_space<vmem>>, %arg5: memref<12x32xf32, #tpu.memory_space<vmem>>, %arg6: memref<32x1xf32, #tpu.memory_space<vmem>>, %arg7: memref<8x8xf32, #tpu.memory_space<vmem>>, %arg8: memref<8x16xf32, #tpu.memory_space<vmem>>, %arg9: memref<8x8xf32, #tpu.memory_space<vmem>>) attributes {dimension_semantics = [#tpu.dimension_semantics<parallel>], iteration_bounds = array<i64: 1>, scalar_prefetch = 0 : i64, scratch_operands = 0 : i64, tpu.core_type = #tpu.core_type<tc>, window_params = [{transform_indices = @transform_0, window_bounds = array<i64: 8, 8, 16>}, {transform_indices = @transform_1, window_bounds = array<i64: 8, 8>}, {transform_indices = @transform_2, window_bounds = array<i64: 8, 12>}, {pipeline_mode = #tpu.pipeline_mode<synchronous>, transform_indices = @transform_3, window_bounds = array<i64: 16, 32>}, {pipeline_mode = #tpu.pipeline_mode<synchronous>, transform_indices = @transform_4, window_bounds = array<i64: 12, 32>}, {pipeline_mode = #tpu.pipeline_mode<synchronous>, transform_indices = @transform_5, window_bounds = array<i64: 32, 1>}, {transform_indices = @transform_6, window_bounds = array<i64: 8, 8>}, {transform_indices = @transform_7, window_bounds = array<i64: 8, 16>}, {transform_indices = @transform_8, window_bounds = array<i64: 8, 8>}]} {
    %c0 = arith.constant 0 : index
    %c0_0 = arith.constant 0 : index
    %0 = vector.load %arg4[%c0, %c0_0] : memref<16x32xf32, #tpu.memory_space<vmem>>, vector<16x32xf32>
    %c0_1 = arith.constant 0 : index
    %c0_2 = arith.constant 0 : index
    %1 = vector.load %arg5[%c0_1, %c0_2] : memref<12x32xf32, #tpu.memory_space<vmem>>, vector<12x32xf32>
    %c0_3 = arith.constant 0 : index
    %c0_4 = arith.constant 0 : index
    %2 = vector.load %arg6[%c0_3, %c0_4] : memref<32x1xf32, #tpu.memory_space<vmem>>, vector<32x1xf32>
    %3 = vector.shape_cast %2 : vector<32x1xf32> to vector<32xf32>
    %c0_5 = arith.constant 0 : index
    %c0_6 = arith.constant 0 : index
    %4 = vector.load %arg3[%c0_5, %c0_6] : memref<8x12xf32, #tpu.memory_space<vmem>>, vector<8x12xf32>
    %cst = arith.constant dense<0.000000e+00> : vector<8x32xf32>
    %5 = tpu.matmul %4, %1, %cst {dimension_numbers = #tpu.dot_dimension_numbers<[1], [0], [0], [1], [0, 0, 1, 1], [], []>} : vector<8x12xf32>, vector<12x32xf32>, vector<8x32xf32> -> vector<8x32xf32>
    %c0_7 = arith.constant 0 : index
    %c0_8 = arith.constant 0 : index
    %c0_9 = arith.constant 0 : index
    %6 = vector.load %arg1[%c0_7, %c0_8, %c0_9] : memref<8x8x16xf32, #tpu.memory_space<vmem>>, vector<8x8x16xf32>
    %7 = vector.shape_cast %6 : vector<8x8x16xf32> to vector<64x16xf32>
    %cst_10 = arith.constant dense<0.000000e+00> : vector<64x32xf32>
    %8 = tpu.matmul %7, %0, %cst_10 {dimension_numbers = #tpu.dot_dimension_numbers<[1], [0], [0], [1], [0, 0, 1, 1], [], []>} : vector<64x16xf32>, vector<16x32xf32>, vector<64x32xf32> -> vector<64x32xf32>
    %9 = vector.shape_cast %8 : vector<64x32xf32> to vector<8x8x32xf32>
    %10 = vector.shape_cast %5 : vector<8x32xf32> to vector<8x1x32xf32>
    %11 = vector.broadcast %10 : vector<8x1x32xf32> to vector<8x8x32xf32>
    %12 = arith.addf %9, %11 : vector<8x8x32xf32>
    %13 = math.tanh %12 : vector<8x8x32xf32>
    %14 = vector.shape_cast %3 : vector<32xf32> to vector<1x1x32xf32>
    %15 = vector.broadcast %14 : vector<1x1x32xf32> to vector<8x8x32xf32>
    %16 = arith.mulf %13, %15 : vector<8x8x32xf32>
    %cst_11 = arith.constant dense<0.000000e+00> : vector<8x8xf32>
    %17 = vector.multi_reduction <add>, %16, %cst_11 [2] : vector<8x8x32xf32> to vector<8x8xf32>
    %c0_12 = arith.constant 0 : index
    %c0_13 = arith.constant 0 : index
    %18 = vector.load %arg2[%c0_12, %c0_13] : memref<8x8xf32, #tpu.memory_space<vmem>>, vector<8x8xf32>
    %cst_14 = arith.constant dense<0.000000e+00> : vector<8xf32>
    %19 = vector.multi_reduction <add>, %18, %cst_14 [1] : vector<8x8xf32> to vector<8xf32>
    %20 = vector.shape_cast %19 : vector<8xf32> to vector<8x1xf32>
    %cst_15 = arith.constant 0.000000e+00 : f32
    %21 = vector.broadcast %cst_15 : f32 to vector<8x1xf32>
    %22 = arith.cmpf oeq, %20, %21 : vector<8x1xf32>
    %cst_16 = arith.constant 0.000000e+00 : f32
    %23 = vector.broadcast %cst_16 : f32 to vector<8x8xf32>
    %24 = arith.cmpf oeq, %18, %23 : vector<8x8xf32>
    %cst_17 = arith.constant 0xFF800000 : f32
    %cst_18 = arith.constant 0.000000e+00 : f32
    %25 = vector.broadcast %cst_17 : f32 to vector<8x8xf32>
    %26 = vector.broadcast %cst_18 : f32 to vector<8x8xf32>
    %27 = arith.select %24, %25, %26 : vector<8x8xi1>, vector<8x8xf32>
    %cst_19 = arith.constant 0.000000e+00 : f32
    %28 = vector.shape_cast %22 : vector<8x1xi1> to vector<8x1xi1>
    %29 = vector.broadcast %28 : vector<8x1xi1> to vector<8x8xi1>
    %30 = vector.broadcast %cst_19 : f32 to vector<8x8xf32>
    %31 = arith.select %29, %30, %27 : vector<8x8xi1>, vector<8x8xf32>
    %32 = arith.addf %17, %31 : vector<8x8xf32>
    %cst_20 = arith.constant dense<0xFF800000> : vector<8xf32>
    %33 = vector.multi_reduction <maximumf>, %32, %cst_20 [1] : vector<8x8xf32> to vector<8xf32>
    %34 = vector.shape_cast %33 : vector<8xf32> to vector<8x1xf32>
    %35 = vector.broadcast %34 : vector<8x1xf32> to vector<8x8xf32>
    %36 = arith.subf %32, %35 : vector<8x8xf32>
    %37 = math.exp %36 : vector<8x8xf32>
    %cst_21 = arith.constant dense<0.000000e+00> : vector<8xf32>
    %38 = vector.multi_reduction <add>, %37, %cst_21 [1] : vector<8x8xf32> to vector<8xf32>
    %39 = vector.shape_cast %38 : vector<8xf32> to vector<8x1xf32>
    %40 = tpu.reciprocal %39 {approx = true} : vector<8x1xf32> -> vector<8x1xf32>
    %41 = vector.broadcast %40 : vector<8x1xf32> to vector<8x8xf32>
    %42 = arith.mulf %37, %41 : vector<8x8xf32>
    %cst_22 = arith.constant 0.000000e+00 : f32
    %43 = vector.shape_cast %22 : vector<8x1xi1> to vector<8x1xi1>
    %44 = vector.broadcast %43 : vector<8x1xi1> to vector<8x8xi1>
    %45 = vector.broadcast %cst_22 : f32 to vector<8x8xf32>
    %46 = arith.select %44, %45, %42 : vector<8x8xi1>, vector<8x8xf32>
    %47 = vector.shape_cast %46 : vector<8x8xf32> to vector<8x1x8xf32>
    %c0_23 = arith.constant 0 : index
    %c0_24 = arith.constant 0 : index
    %c0_25 = arith.constant 0 : index
    %48 = vector.load %arg1[%c0_23, %c0_24, %c0_25] : memref<8x8x16xf32, #tpu.memory_space<vmem>>, vector<8x8x16xf32>
    "tpu.trace_start"() <{level = 10 : i32, message = "bqc,bcd->bqd"}> : () -> ()
    %cst_26 = arith.constant dense<0.000000e+00> : vector<8x1x16xf32>
    %49 = tpu.matmul %47, %48, %cst_26 {dimension_numbers = #tpu.dot_dimension_numbers<[2], [1], [1], [2], [0, 0, 0, 1, 1, 2], [0], [0]>} : vector<8x1x8xf32>, vector<8x8x16xf32>, vector<8x1x16xf32> -> vector<8x1x16xf32>
    "tpu.trace_stop"() : () -> ()
    %50 = vector.shape_cast %49 : vector<8x1x16xf32> to vector<8x16xf32>
    %c0_27 = arith.constant 0 : index
    %c0_28 = arith.constant 0 : index
    %51 = vector.load %arg7[%c0_27, %c0_28] : memref<8x8xf32, #tpu.memory_space<vmem>>, vector<8x8xf32>
    tpu.vector_store %arg7[%c0_27, %c0_28], %46 {strides = array<i32>} : memref<8x8xf32, #tpu.memory_space<vmem>>, vector<8x8xf32>,
    %c0_29 = arith.constant 0 : index
    %c0_30 = arith.constant 0 : index
    %52 = vector.load %arg8[%c0_29, %c0_30] : memref<8x16xf32, #tpu.memory_space<vmem>>, vector<8x16xf32>
    tpu.vector_store %arg8[%c0_29, %c0_30], %50 {strides = array<i32>} : memref<8x16xf32, #tpu.memory_space<vmem>>, vector<8x16xf32>,
    %c0_31 = arith.constant 0 : index
    %c0_32 = arith.constant 0 : index
    %53 = vector.load %arg9[%c0_31, %c0_32] : memref<8x8xf32, #tpu.memory_space<vmem>>, vector<8x8xf32>
    tpu.vector_store %arg9[%c0_31, %c0_32], %32 {strides = array<i32>} : memref<8x8xf32, #tpu.memory_space<vmem>>, vector<8x8xf32>,
    return
  }
  func.func @transform_0(%arg0: i32) -> (i32, i32, i32) {
    %c0_i32 = arith.constant 0 : i32
    %c0_i32_0 = arith.constant 0 : i32
    %c0_i32_1 = arith.constant 0 : i32
    return %arg0, %c0_i32, %c0_i32_0 : i32, i32, i32
  }
  func.func @transform_1(%arg0: i32) -> (i32, i32) {
    %c0_i32 = arith.constant 0 : i32
    %c0_i32_0 = arith.constant 0 : i32
    return %arg0, %c0_i32 : i32, i32
  }
  func.func @transform_2(%arg0: i32) -> (i32, i32) {
    %c0_i32 = arith.constant 0 : i32
    %c0_i32_0 = arith.constant 0 : i32
    return %arg0, %c0_i32 : i32, i32
  }
  func.func @transform_3(%arg0: i32) -> (i32, i32) {
    %c0_i32 = arith.constant 0 : i32
    %c0_i32_0 = arith.constant 0 : i32
    %c0_i32_1 = arith.constant 0 : i32
    return %c0_i32, %c0_i32_0 : i32, i32
  }
  func.func @transform_4(%arg0: i32) -> (i32, i32) {
    %c0_i32 = arith.constant 0 : i32
    %c0_i32_0 = arith.constant 0 : i32
    %c0_i32_1 = arith.constant 0 : i32
    return %c0_i32, %c0_i32_0 : i32, i32
  }
  func.func @transform_5(%arg0: i32) -> (i32, i32) {
    %c0_i32 = arith.constant 0 : i32
    %c0_i32_0 = arith.constant 0 : i32
    %c0_i32_1 = arith.constant 0 : i32
    return %c0_i32, %c0_i32_0 : i32, i32
  }
  func.func @transform_6(%arg0: i32) -> (i32, i32) {
    %c0_i32 = arith.constant 0 : i32
    %c0_i32_0 = arith.constant 0 : i32
    return %arg0, %c0_i32 : i32, i32
  }
  func.func @transform_7(%arg0: i32) -> (i32, i32) {
    %c0_i32 = arith.constant 0 : i32
    %c0_i32_0 = arith.constant 0 : i32
    return %arg0, %c0_i32 : i32, i32
  }
  func.func @transform_8(%arg0: i32) -> (i32, i32) {
    %c0_i32 = arith.constant 0 : i32
    %c0_i32_0 = arith.constant 0 : i32
    return %arg0, %c0_i32 : i32, i32
  }
}

</mosaic_0001>

<llo_original>
// kernel: tpu_custom_call.1
$region0: #{tpu_custom_call.1}
  #allocation0 [shape = 'u32[]', space=smem, size = 0x4, offset = 0x4, fixed_abs, tag = 'smem constant byte address 0x4 - core index']
  #allocation1 [shape = 'u32[144,128]{1,0:T(1,128)}', space=vmem, size = 0x12000, scoped, tag = 'internal scratch']
  %s0 = inlined_call_operand.hbm [shape: f32[8,8,16], index: 0, kind: input, shape index: {}]
  %s1 = inlined_call_operand.hbm [shape: f32[8,8], index: 1, kind: input, shape index: {}]
  %s2 = inlined_call_operand.vmem [shape: f32[8,12], index: 2, kind: input, shape index: {}]
  %s3 = inlined_call_operand.vmem [shape: f32[16,32], index: 3, kind: input, shape index: {}]
  %s4 = inlined_call_operand.vmem [shape: f32[12,32], index: 4, kind: input, shape index: {}]
  %s5 = inlined_call_operand.vmem [shape: f32[32,1], index: 5, kind: input, shape index: {}]
  %s6 = inlined_call_operand.hbm [shape: f32[8,8], index: 6, kind: output, shape index: {0}]
  %s7 = inlined_call_operand.hbm [shape: f32[8,16], index: 7, kind: output, shape index: {1}]
  %s8 = inlined_call_operand.hbm [shape: f32[8,8], index: 8, kind: output, shape index: {2}]
  %9 = xla_tuple %s6, %s7, %s8
  %s10 = sld [smem:[#allocation0]]
  $region58: #{tpu_custom_call.1} parent=0
    _
  %s12 = ssub.s32 1, %s10
  %s13 = scalar_select 0, %s12, %s10
  $region1: #{tpu_custom_call.1} parent=0
    #allocation2 [shape = 'u8[32768]{0}', space=vmem, size = 0x8000, scoped, tag = 'input window, operand 0, single buffered']
    #allocation3 [shape = 's32[1]{0}', space=sflag, size = 0x4, scoped, tag = 'scoped memory for tpu_custom_call.1']
    #allocation4 [shape = 's32[1]{0}', space=sflag, size = 0x4, scoped, tag = 'scoped memory for tpu_custom_call.1']
    #allocation5 [shape = 'u8[4096]{0}', space=vmem, size = 0x1000, scoped, tag = 'input window, operand 1, single buffered']
    #allocation6 [shape = 's32[1]{0}', space=sflag, size = 0x4, scoped, tag = 'scoped memory for tpu_custom_call.1']
    #allocation7 [shape = 'u8[4096]{0}', space=vmem, size = 0x1000, scoped, tag = 'output window, operand 0, single buffered']
    #allocation8 [shape = 'u8[4096]{0}', space=vmem, size = 0x1000, scoped, tag = 'output window, operand 1, single buffered']
    #allocation9 [shape = 's32[1]{0}', space=sflag, size = 0x4, scoped, tag = 'scoped memory for tpu_custom_call.1']
    #allocation10 [shape = 'u8[4096]{0}', space=vmem, size = 0x1000, scoped, tag = 'output window, operand 2, single buffered']
    %14 = vsyncpa [#allocation3], 0
    %15 = vsyncpa [#allocation6], 0
    %16 = vsyncpa [#allocation4], 0
    %17 = vsyncpa [#allocation9], 0
    // Predicated region
    $region2: #{tpu_custom_call.1} parent=1 // pred_check
      _
    $region3: #{tpu_custom_call.1} parent=1 // pred_check_branch
      %19 = sbr.rel (0) target = $region5
    $region4: #{tpu_custom_call.1} parent=1 // pred_region
      %s21 = ssub.s32 1024, 1024
      %22 = vsyncadd [#allocation3], %s21
      %s23 = sshll.u32 [#allocation2], 4
      %s24 = int_to_ptr.vmem [resolvable:$true] %s23
      %29 = dma.hbm_to_vmem [thread:$0]  %s0, 1024, %s24, [#allocation3], 128, 128, 8
    $region5: #{tpu_custom_call.1} parent=1 // pred_fallthru
      _
    // Predicated region
    $region6: #{tpu_custom_call.1} parent=1 // pred_check
      _
    $region7: #{tpu_custom_call.1} parent=1 // pred_check_branch
      %31 = sbr.rel (0) target = $region9
    $region8: #{tpu_custom_call.1} parent=1 // pred_region
      %s33 = ssub.s32 128, 128
      %34 = vsyncadd [#allocation6], %s33
      %s36 = sshll.u32 [#allocation5], 4
      %s37 = int_to_ptr.vmem [resolvable:$true] %s36
      %39 = dma.hbm_to_vmem [thread:$0]  %s1, 128, %s37, [#allocation6]
    $region9: #{tpu_custom_call.1} parent=1 // pred_fallthru
      _
    // Predicated region
    $region10: #{tpu_custom_call.1} parent=1 // pred_check
      _
    $region11: #{tpu_custom_call.1} parent=1 // pred_check_branch
      %41 = sbr.rel (0) target = $region13
    $region12: #{tpu_custom_call.1} parent=1 // pred_region
      _
    $region13: #{tpu_custom_call.1} parent=1 // pred_fallthru
      _
    // Predicated region
    $region14: #{tpu_custom_call.1} parent=1 // pred_check
      _
    $region15: #{tpu_custom_call.1} parent=1 // pred_check_branch
      %43 = sbr.rel (0) target = $region17
    $region16: #{tpu_custom_call.1} parent=1 // pred_region
      _
    $region17: #{tpu_custom_call.1} parent=1 // pred_fallthru
      _
    // Predicated region
    $region18: #{tpu_custom_call.1} parent=1 // pred_check
      _
    $region19: #{tpu_custom_call.1} parent=1 // pred_check_branch
      %45 = sbr.rel (0) target = $region21
    $region20: #{tpu_custom_call.1} parent=1 // pred_region
      _
    $region21: #{tpu_custom_call.1} parent=1 // pred_fallthru
      _
    // Predicated region
    $region22: #{tpu_custom_call.1} parent=1 // pred_check
      _
    $region23: #{tpu_custom_call.1} parent=1 // pred_check_branch
      %47 = sbr.rel (0) target = $region25
    $region24: #{tpu_custom_call.1} parent=1 // pred_region
      _
    $region25: #{tpu_custom_call.1} parent=1 // pred_fallthru
      _
    // Predicated region
    $region26: #{tpu_custom_call.1} parent=1 // pred_check
      _
    $region27: #{tpu_custom_call.1} parent=1 // pred_check_branch
      %49 = sbr.rel (0) target = $region29
    $region28: #{tpu_custom_call.1} parent=1 // pred_region
      %50 = dma.done [#allocation3], 1024
    $region29: #{tpu_custom_call.1} parent=1 // pred_fallthru
      _
    // Predicated region
    $region30: #{tpu_custom_call.1} parent=1 // pred_check
      _
    $region31: #{tpu_custom_call.1} parent=1 // pred_check_branch
      %52 = sbr.rel (0) target = $region33
    $region32: #{tpu_custom_call.1} parent=1 // pred_region
      %53 = dma.done [#allocation6], 128
    $region33: #{tpu_custom_call.1} parent=1 // pred_fallthru
      _
    %v54 = vld [vmem:[%s3] sm:$0xff]
    %v55 = vld [vmem:[%s3 + $0x8] sm:$0xff]
    %v56 = vld [vmem:[%s4] sm:$0xff]
    %v57 = vld [vmem:[%s4 + $0x8] sm:$0xf]
    %v58 = vld [vmem:[%s5] sm:$0xff]
    %v59 = vld [vmem:[%s5 + $0x8] sm:$0xff]
    %v60 = vld [vmem:[%s5 + $0x10] sm:$0xff]
    %v61 = vld [vmem:[%s5 + $0x18] sm:$0xff]
    %v62 = vld [vmem:[%s2] sm:$0xff]
    %vm63 = vcmask 97280
    %v65 = vsel %vm63, %v62, 0
    %vm67 = vcmask 1043456
    %v69 = vsel %vm67, %v57, 0
    %71 = vmatprep.subr.mxu0 0.0
    %72 = vmatpush1.msra.mxu0 %v56
    %73 = vmatprep.subr.mxu0 0.0
    %74 = vmatpush1.msra.mxu0 %v69
    %75 = vmatprep.subr.mxu0 0.0
    %76 = vmatpush1.msra.mxu0 0.0
    %77 = vmatprep.subr.mxu0 0.0
    %78 = vmatpush1.msra.mxu0 0.0
    %79 = vmatprep.subr.mxu0 0.0
    %80 = vmatpush1.msra.mxu0 0.0
    %81 = vmatprep.subr.mxu0 0.0
    %82 = vmatpush1.msra.mxu0 0.0
    %83 = vmatprep.subr.mxu0 0.0
    %84 = vmatpush1.msra.mxu0 0.0
    %85 = vmatprep.subr.mxu0 0.0
    %86 = vmatpush1.msra.mxu0 0.0
    %87 = vmatprep.subr.mxu0 0.0
    %88 = vmatpush1.msra.mxu0 0.0
    %89 = vmatprep.subr.mxu0 0.0
    %90 = vmatpush1.msra.mxu0 0.0
    %91 = vmatprep.subr.mxu0 0.0
    %92 = vmatpush1.msra.mxu0 0.0
    %93 = vmatprep.subr.mxu0 0.0
    %94 = vmatpush1.msra.mxu0 0.0
    %95 = vmatprep.subr.mxu0 0.0
    %96 = vmatpush1.msra.mxu0 0.0
    %97 = vmatprep.subr.mxu0 0.0
    %98 = vmatpush1.msra.mxu0 0.0
    %99 = vmatprep.subr.mxu0 0.0
    %100 = vmatpush1.msra.mxu0 0.0
    %101 = vmatprep.subr.mxu0 0.0
    %102 = vmatpush1.msra.mxu0 0.0
    %103 = vmatprep.subr.mxu0 0.0
    %104 = vmatpush1.msra.mxu0 0.0
    %105 = vmatprep.subr.mxu0 0.0
    %106 = vmatpush1.msra.mxu0 0.0
    %107 = vmatprep.subr.mxu0 0.0
    %108 = vmatpush1.msra.mxu0 0.0
    %109 = vmatprep.subr.mxu0 0.0
    %110 = vmatpush1.msra.mxu0 0.0
    %111 = vmatprep.subr.mxu0 0.0
    %112 = vmatpush1.msra.mxu0 0.0
    %113 = vmatprep.subr.mxu0 0.0
    %114 = vmatpush1.msra.mxu0 0.0
    %115 = vmatprep.subr.mxu0 0.0
    %116 = vmatpush1.msra.mxu0 0.0
    %117 = vmatprep.subr.mxu0 0.0
    %118 = vmatpush1.msra.mxu0 0.0
    %119 = vmatprep.subr.mxu0 0.0
    %120 = vmatpush1.msra.mxu0 0.0
    %121 = vmatprep.subr.mxu0 0.0
    %122 = vmatpush1.msra.mxu0 0.0
    %123 = vmatprep.subr.mxu0 0.0
    %124 = vmatpush1.msra.mxu0 0.0
    %125 = vmatprep.subr.mxu0 0.0
    %126 = vmatpush1.msra.mxu0 0.0
    %127 = vmatprep.subr.mxu0 0.0
    %128 = vmatpush1.msra.mxu0 0.0
    %129 = vmatprep.subr.mxu0 0.0
    %130 = vmatpush1.msra.mxu0 0.0
    %131 = vmatprep.subr.mxu0 0.0
    %132 = vmatpush1.msra.mxu0 0.0
    %133 = vmatprep.subr.mxu0 0.0
    %134 = vmatpush1.msra.mxu0 0.0
    %135 = vmatprep.mubr.f32.mxu0 0.0
    %136 = vmatmul.mubr.f32.gmra.mrb[0].mxu0 %v65
    %v137 = vpop.f32.mrb[0].mxu0
    %v138 = vadd.f32 0.0, %v137
    %v139 = vpop.f32.mrb[0].mxu0
    %140 = vdwg.mxu0
    %v141 = vld [vmem:[#allocation2] sm:$0xff]
    %v142 = vld [vmem:[#allocation2 + $0x8] sm:$0xff]
    %v143 = vld [vmem:[#allocation2 + $0x10] sm:$0xff]
    %v144 = vld [vmem:[#allocation2 + $0x18] sm:$0xff]
    %v145 = vld [vmem:[#allocation2 + $0x20] sm:$0xff]
    %v146 = vld [vmem:[#allocation2 + $0x28] sm:$0xff]
    %v147 = vld [vmem:[#allocation2 + $0x30] sm:$0xff]
    %v148 = vld [vmem:[#allocation2 + $0x38] sm:$0xff]
    %vm149 = vcmask 130048
    %v151 = vsel %vm149, %v141, 0
    %v154 = vsel %vm149, %v142, 0
    %v157 = vsel %vm149, %v143, 0
    %v160 = vsel %vm149, %v144, 0
    %v163 = vsel %vm149, %v145, 0
    %v166 = vsel %vm149, %v146, 0
    %v169 = vsel %vm149, %v147, 0
    %v172 = vsel %vm149, %v148, 0
    %174 = vmatprep.subr.mxu0 0.0
    %175 = vmatpush1.msra.mxu0 %v54
    %176 = vmatprep.subr.mxu0 0.0
    %177 = vmatpush1.msra.mxu0 %v55
    %178 = vmatprep.subr.mxu0 0.0
    %179 = vmatpush1.msra.mxu0 0.0
    %180 = vmatprep.subr.mxu0 0.0
    %181 = vmatpush1.msra.mxu0 0.0
    %182 = vmatprep.subr.mxu0 0.0
    %183 = vmatpush1.msra.mxu0 0.0
    %184 = vmatprep.subr.mxu0 0.0
    %185 = vmatpush1.msra.mxu0 0.0
    %186 = vmatprep.subr.mxu0 0.0
    %187 = vmatpush1.msra.mxu0 0.0
    %188 = vmatprep.subr.mxu0 0.0
    %189 = vmatpush1.msra.mxu0 0.0
    %190 = vmatprep.subr.mxu0 0.0
    %191 = vmatpush1.msra.mxu0 0.0
    %192 = vmatprep.subr.mxu0 0.0
    %193 = vmatpush1.msra.mxu0 0.0
    %194 = vmatprep.subr.mxu0 0.0
    %195 = vmatpush1.msra.mxu0 0.0
    %196 = vmatprep.subr.mxu0 0.0
    %197 = vmatpush1.msra.mxu0 0.0
    %198 = vmatprep.subr.mxu0 0.0
    %199 = vmatpush1.msra.mxu0 0.0
    %200 = vmatprep.subr.mxu0 0.0
    %201 = vmatpush1.msra.mxu0 0.0
    %202 = vmatprep.subr.mxu0 0.0
    %203 = vmatpush1.msra.mxu0 0.0
    %204 = vmatprep.subr.mxu0 0.0
    %205 = vmatpush1.msra.mxu0 0.0
    %206 = vmatprep.subr.mxu0 0.0
    %207 = vmatpush1.msra.mxu0 0.0
    %208 = vmatprep.subr.mxu0 0.0
    %209 = vmatpush1.msra.mxu0 0.0
    %210 = vmatprep.subr.mxu0 0.0
    %211 = vmatpush1.msra.mxu0 0.0
    %212 = vmatprep.subr.mxu0 0.0
    %213 = vmatpush1.msra.mxu0 0.0
    %214 = vmatprep.subr.mxu0 0.0
    %215 = vmatpush1.msra.mxu0 0.0
    %216 = vmatprep.subr.mxu0 0.0
    %217 = vmatpush1.msra.mxu0 0.0
    %218 = vmatprep.subr.mxu0 0.0
    %219 = vmatpush1.msra.mxu0 0.0
    %220 = vmatprep.subr.mxu0 0.0
    %221 = vmatpush1.msra.mxu0 0.0
    %222 = vmatprep.subr.mxu0 0.0
    %223 = vmatpush1.msra.mxu0 0.0
    %224 = vmatprep.subr.mxu0 0.0
    %225 = vmatpush1.msra.mxu0 0.0
    %226 = vmatprep.subr.mxu0 0.0
    %227 = vmatpush1.msra.mxu0 0.0
    %228 = vmatprep.subr.mxu0 0.0
    %229 = vmatpush1.msra.mxu0 0.0
    %230 = vmatprep.subr.mxu0 0.0
    %231 = vmatpush1.msra.mxu0 0.0
    %232 = vmatprep.subr.mxu0 0.0
    %233 = vmatpush1.msra.mxu0 0.0
    %234 = vmatprep.subr.mxu0 0.0
    %235 = vmatpush1.msra.mxu0 0.0
    %236 = vmatprep.subr.mxu0 0.0
    %237 = vmatpush1.msra.mxu0 0.0
    %238 = vmatprep.mubr.f32.mxu0 0.0
    %239 = vmatmul.mubr.f32.gmra.mrb[0].mxu0 %v151
    %v240 = vpop.f32.mrb[0].mxu0
    %v241 = vadd.f32 0.0, %v240
    %v242 = vpop.f32.mrb[0].mxu0
    %243 = vmatprep.mubr.f32.mxu0 0.0
    %244 = vmatmul.mubr.f32.gmra.mrb[0].mxu0 %v154
    %v245 = vpop.f32.mrb[0].mxu0
    %v246 = vadd.f32 0.0, %v245
    %v247 = vpop.f32.mrb[0].mxu0
    %248 = vmatprep.mubr.f32.mxu0 0.0
    %249 = vmatmul.mubr.f32.gmra.mrb[0].mxu0 %v157
    %v250 = vpop.f32.mrb[0].mxu0
    %v251 = vadd.f32 0.0, %v250
    %v252 = vpop.f32.mrb[0].mxu0
    %253 = vmatprep.mubr.f32.mxu0 0.0
    %254 = vmatmul.mubr.f32.gmra.mrb[0].mxu0 %v160
    %v255 = vpop.f32.mrb[0].mxu0
    %v256 = vadd.f32 0.0, %v255
    %v257 = vpop.f32.mrb[0].mxu0
    %258 = vmatprep.mubr.f32.mxu0 0.0
    %259 = vmatmul.mubr.f32.gmra.mrb[0].mxu0 %v163
    %v260 = vpop.f32.mrb[0].mxu0
    %v261 = vadd.f32 0.0, %v260
    %v262 = vpop.f32.mrb[0].mxu0
    %263 = vmatprep.mubr.f32.mxu0 0.0
    %264 = vmatmul.mubr.f32.gmra.mrb[0].mxu0 %v166
    %v265 = vpop.f32.mrb[0].mxu0
    %v266 = vadd.f32 0.0, %v265
    %v267 = vpop.f32.mrb[0].mxu0
    %268 = vmatprep.mubr.f32.mxu0 0.0
    %269 = vmatmul.mubr.f32.gmra.mrb[0].mxu0 %v169
    %v270 = vpop.f32.mrb[0].mxu0
    %v271 = vadd.f32 0.0, %v270
    %v272 = vpop.f32.mrb[0].mxu0
    %273 = vmatprep.mubr.f32.mxu0 0.0
    %274 = vmatmul.mubr.f32.gmra.mrb[0].mxu0 %v172
    %v275 = vpop.f32.mrb[0].mxu0
    %v276 = vadd.f32 0.0, %v275
    %v277 = vpop.f32.mrb[0].mxu0
    %278 = vdwg.mxu0
    %v280 = vcombine.high %v138, %v138
    %v282 = vunpack.c.l.s4 1966171168
    %v283 = vunpack.c.0.s8 %v282
    %v284 = vlaneseq
    %v285 = vshrl.u32 %v284, 7
    %v286 = vsub.s32 %v283, %v285
    %v287 = vrot.slane %v138, %v286
    %v289 = vunpack.c.l.s4 1966171168
    %v290 = vunpack.c.0.s8 %v289
    %v291 = vlaneseq
    %v292 = vshrl.u32 %v291, 7
    %v293 = vsub.s32 %v290, %v292
    %v294 = vrot.slane %v280, %v293
    %v295 = vcombine.high %v287, %v287
    %v296 = vcombine.high %v294, %v294
    %v298 = vunpack.c.l.s4 1966171168
    %v299 = vunpack.c.0.s8 %v298
    %v300 = vlaneseq
    %v301 = vshrl.u32 %v300, 7
    %v302 = vsub.s32 %v299, %v301
    %v303 = vrot.slane %v287, %v302
    %v305 = vunpack.c.l.s4 1966171168
    %v306 = vunpack.c.0.s8 %v305
    %v307 = vlaneseq
    %v308 = vshrl.u32 %v307, 7
    %v309 = vsub.s32 %v306, %v308
    %v310 = vrot.slane %v294, %v309
    %v312 = vunpack.c.l.s4 1966171168
    %v313 = vunpack.c.0.s8 %v312
    %v314 = vlaneseq
    %v315 = vshrl.u32 %v314, 7
    %v316 = vsub.s32 %v313, %v315
    %v317 = vrot.slane %v295, %v316
    %v319 = vunpack.c.l.s4 1966171168
    %v320 = vunpack.c.0.s8 %v319
    %v321 = vlaneseq
    %v322 = vshrl.u32 %v321, 7
    %v323 = vsub.s32 %v320, %v322
    %v324 = vrot.slane %v296, %v323
    %v325 = vcombine.high %v303, %v303
    %v326 = vcombine.high %v310, %v310
    %v327 = vcombine.high %v317, %v317
    %v328 = vcombine.high %v324, %v324
    %v329 = vlaneseq
    %v330 = vshrl.u32 %v329, 7
    %v331 = vsub.s32 0, %v330
    %v332 = vrot.slane %v303, %v331
    %v333 = vlaneseq
    %v334 = vshrl.u32 %v333, 7
    %v335 = vsub.s32 0, %v334
    %v336 = vrot.slane %v317, %v335
    %v337 = vlaneseq
    %v338 = vshrl.u32 %v337, 7
    %v339 = vsub.s32 0, %v338
    %v340 = vrot.slane %v325, %v339
    %v341 = vlaneseq
    %v342 = vshrl.u32 %v341, 7
    %v343 = vsub.s32 0, %v342
    %v344 = vrot.slane %v327, %v343
    %v345 = vlaneseq
    %v346 = vshrl.u32 %v345, 7
    %v347 = vsub.s32 0, %v346
    %v348 = vrot.slane %v310, %v347
    %v349 = vlaneseq
    %v350 = vshrl.u32 %v349, 7
    %v351 = vsub.s32 0, %v350
    %v352 = vrot.slane %v324, %v351
    %v353 = vlaneseq
    %v354 = vshrl.u32 %v353, 7
    %v355 = vsub.s32 0, %v354
    %v356 = vrot.slane %v326, %v355
    %v357 = vlaneseq
    %v358 = vshrl.u32 %v357, 7
    %v359 = vsub.s32 0, %v358
    %v360 = vrot.slane %v328, %v359
    %v369 = vadd.f32 %v241, %v332
    %v370 = vadd.f32 %v246, %v336
    %v371 = vadd.f32 %v251, %v340
    %v372 = vadd.f32 %v256, %v344
    %v373 = vadd.f32 %v261, %v348
    %v374 = vadd.f32 %v266, %v352
    %v375 = vadd.f32 %v271, %v356
    %v376 = vadd.f32 %v276, %v360
    %v377 = vtanh.pop %v369
    %v378 = vtanh.pop %v370
    %v379 = vtanh.pop %v371
    %v380 = vtanh.pop %v372
    %v381 = vtanh.pop %v373
    %v382 = vtanh.pop %v374
    %v383 = vtanh.pop %v375
    %v384 = vtanh.pop %v376
    %389 = vset.pattern.permute.xlu0 0
    %390 = vperm.xlu0 %389, %v58
    %v391 = vpop.permute.xlu0 %390
    %392 = vset.pattern.permute.xlu0 0
    %393 = vperm.xlu0 %392, %v59
    %v394 = vpop.permute.xlu0 %393
    %395 = vset.pattern.permute.xlu0 0
    %396 = vperm.xlu0 %395, %v60
    %v397 = vpop.permute.xlu0 %396
    %398 = vset.pattern.permute.xlu0 0
    %399 = vperm.xlu0 %398, %v61
    %v400 = vpop.permute.xlu0 %399
    %v401 = vlaneseq
    %v402 = vand.u32 %v401, 127
    %v403 = vlaneseq
    %v404 = vshrl.u32 %v403, 7
    %v405 = vsub.s32 %v402, %v404
    %v406 = vrot.slane %v391, %v405
    %v407 = vadd.s32 %v402, 4294967288
    %v408 = vlaneseq
    %v409 = vshrl.u32 %v408, 7
    %v410 = vsub.s32 %v407, %v409
    %v411 = vrot.slane %v394, %v410
    %vm412 = vcmask 130112
    %v413 = vsel %vm412, %v411, %v406
    %v414 = vadd.s32 %v402, 4294967280
    %v415 = vlaneseq
    %v416 = vshrl.u32 %v415, 7
    %v417 = vsub.s32 %v414, %v416
    %v418 = vrot.slane %v397, %v417
    %vm419 = vcmask 195712
    %v420 = vsel %vm419, %v418, %v413
    %v421 = vadd.s32 %v402, 4294967272
    %v422 = vlaneseq
    %v423 = vshrl.u32 %v422, 7
    %v424 = vsub.s32 %v421, %v423
    %v425 = vrot.slane %v400, %v424
    %vm426 = vcmask 261312
    %v427 = vsel %vm426, %v425, %v420
    %vm428 = vcmask 1041409
    %vm429 = vcmask 1042434
    %v430 = vsel %vm429, %v427, %v427
    %vm431 = vcmask 1043459
    %v432 = vsel %vm431, %v427, %v430
    %vm433 = vcmask 1044484
    %v434 = vsel %vm433, %v427, %v432
    %vm435 = vcmask 1045509
    %v436 = vsel %vm435, %v427, %v434
    %vm437 = vcmask 1046534
    %v438 = vsel %vm437, %v427, %v436
    %vm439 = vcmask 1047559
    %v440 = vsel %vm439, %v427, %v438
    %v442 = vmul.f32 %v377, %v440
    %v443 = vmul.f32 %v378, %v440
    %v444 = vmul.f32 %v379, %v440
    %v445 = vmul.f32 %v380, %v440
    %v446 = vmul.f32 %v381, %v440
    %v447 = vmul.f32 %v382, %v440
    %v448 = vmul.f32 %v383, %v440
    %v449 = vmul.f32 %v384, %v440
    %vm450 = vcmask 261120
    %v451 = vsel %vm450, %v442, 0.0
    %452 = vadd.xlane.f32.xlu0 %v451
    %v453 = vpop.xlane.xlu0 %452
    %v454 = vsel %vm450, %v443, 0.0
    %455 = vadd.xlane.f32.xlu0 %v454
    %v456 = vpop.xlane.xlu0 %455
    %v457 = vsel %vm450, %v444, 0.0
    %458 = vadd.xlane.f32.xlu0 %v457
    %v459 = vpop.xlane.xlu0 %458
    %v460 = vsel %vm450, %v445, 0.0
    %461 = vadd.xlane.f32.xlu0 %v460
    %v462 = vpop.xlane.xlu0 %461
    %v463 = vsel %vm450, %v446, 0.0
    %464 = vadd.xlane.f32.xlu0 %v463
    %v465 = vpop.xlane.xlu0 %464
    %v466 = vsel %vm450, %v447, 0.0
    %467 = vadd.xlane.f32.xlu0 %v466
    %v468 = vpop.xlane.xlu0 %467
    %v469 = vsel %vm450, %v448, 0.0
    %470 = vadd.xlane.f32.xlu0 %v469
    %v471 = vpop.xlane.xlu0 %470
    %v472 = vsel %vm450, %v449, 0.0
    %473 = vadd.xlane.f32.xlu0 %v472
    %v474 = vpop.xlane.xlu0 %473
    %v475 = vld [vmem:[#allocation5] sm:$0xff]
    %vm476 = vcmask 64512
    %v477 = vsel %vm476, %v475, 0.0
    %478 = vadd.xlane.f32.xlu0 %v477
    %v479 = vpop.xlane.xlu0 %478
    %vm480 = vcmp.eq.f32.partialorder %v479, 0.0
    %vm481 = vcmp.eq.f32.partialorder %v475, 0.0
    %v482 = vsel %vm481, -inf, 0.0
    %v483 = vsel %vm480, 1, 0
    %vm484 = vcmp.eq.s32.totalorder %v483, 1
    %v485 = vsel %vm484, 0.0, %v482
    %v487 = vlaneseq
    %v488 = vshrl.u32 %v487, 7
    %v489 = vsub.s32 0, %v488
    %v490 = vrot.slane %v485, %v489
    %492 = vbcast.lane.b32.xlu0 %v490, 256
    %v493 = vpop.permute.xlu0 %492
    %v494 = vlaneseq
    %v495 = vshrl.u32 %v494, 7
    %v496 = vsub.s32 1, %v495
    %v497 = vrot.slane %v485, %v496
    %499 = vbcast.lane.b32.xlu0 %v497, 256
    %v500 = vpop.permute.xlu0 %499
    %v501 = vlaneseq
    %v502 = vshrl.u32 %v501, 7
    %v503 = vsub.s32 2, %v502
    %v504 = vrot.slane %v485, %v503
    %506 = vbcast.lane.b32.xlu0 %v504, 256
    %v507 = vpop.permute.xlu0 %506
    %v508 = vlaneseq
    %v509 = vshrl.u32 %v508, 7
    %v510 = vsub.s32 3, %v509
    %v511 = vrot.slane %v485, %v510
    %513 = vbcast.lane.b32.xlu0 %v511, 256
    %v514 = vpop.permute.xlu0 %513
    %v515 = vlaneseq
    %v516 = vshrl.u32 %v515, 7
    %v517 = vsub.s32 4, %v516
    %v518 = vrot.slane %v485, %v517
    %520 = vbcast.lane.b32.xlu0 %v518, 256
    %v521 = vpop.permute.xlu0 %520
    %v522 = vlaneseq
    %v523 = vshrl.u32 %v522, 7
    %v524 = vsub.s32 5, %v523
    %v525 = vrot.slane %v485, %v524
    %527 = vbcast.lane.b32.xlu0 %v525, 256
    %v528 = vpop.permute.xlu0 %527
    %v529 = vlaneseq
    %v530 = vshrl.u32 %v529, 7
    %v531 = vsub.s32 6, %v530
    %v532 = vrot.slane %v485, %v531
    %534 = vbcast.lane.b32.xlu0 %v532, 256
    %v535 = vpop.permute.xlu0 %534
    %v536 = vlaneseq
    %v537 = vshrl.u32 %v536, 7
    %v538 = vsub.s32 7, %v537
    %v539 = vrot.slane %v485, %v538
    %541 = vbcast.lane.b32.xlu0 %v539, 256
    %v542 = vpop.permute.xlu0 %541
    %v551 = vadd.f32 %v453, %v493
    %v552 = vadd.f32 %v456, %v500
    %v553 = vadd.f32 %v459, %v507
    %v554 = vadd.f32 %v462, %v514
    %v555 = vadd.f32 %v465, %v521
    %v556 = vadd.f32 %v468, %v528
    %v557 = vadd.f32 %v471, %v535
    %v558 = vadd.f32 %v474, %v542
    %567 = vset.pattern.permute.xlu0 0
    %568 = vperm.xlu0 %567, %v551
    %v569 = vpop.permute.xlu0 %568
    %570 = vset.pattern.permute.xlu0 0
    %571 = vperm.xlu0 %570, %v552
    %v572 = vpop.permute.xlu0 %571
    %573 = vset.pattern.permute.xlu0 0
    %574 = vperm.xlu0 %573, %v553
    %v575 = vpop.permute.xlu0 %574
    %576 = vset.pattern.permute.xlu0 0
    %577 = vperm.xlu0 %576, %v554
    %v578 = vpop.permute.xlu0 %577
    %579 = vset.pattern.permute.xlu0 0
    %580 = vperm.xlu0 %579, %v555
    %v581 = vpop.permute.xlu0 %580
    %582 = vset.pattern.permute.xlu0 0
    %583 = vperm.xlu0 %582, %v556
    %v584 = vpop.permute.xlu0 %583
    %585 = vset.pattern.permute.xlu0 0
    %586 = vperm.xlu0 %585, %v557
    %v587 = vpop.permute.xlu0 %586
    %588 = vset.pattern.permute.xlu0 0
    %589 = vperm.xlu0 %588, %v558
    %v590 = vpop.permute.xlu0 %589
    %v591 = vlaneseq
    %v592 = vshrl.u32 %v591, 7
    %v593 = vsub.s32 %v402, %v592
    %v594 = vrot.slane %v569, %v593
    %v595 = vlaneseq
    %v596 = vshrl.u32 %v595, 7
    %v597 = vsub.s32 %v402, %v596
    %v598 = vrot.slane %v572, %v597
    %v599 = vlaneseq
    %v600 = vshrl.u32 %v599, 7
    %v601 = vsub.s32 %v402, %v600
    %v602 = vrot.slane %v575, %v601
    %v603 = vlaneseq
    %v604 = vshrl.u32 %v603, 7
    %v605 = vsub.s32 %v402, %v604
    %v606 = vrot.slane %v578, %v605
    %v607 = vlaneseq
    %v608 = vshrl.u32 %v607, 7
    %v609 = vsub.s32 %v402, %v608
    %v610 = vrot.slane %v581, %v609
    %v611 = vlaneseq
    %v612 = vshrl.u32 %v611, 7
    %v613 = vsub.s32 %v402, %v612
    %v614 = vrot.slane %v584, %v613
    %v615 = vlaneseq
    %v616 = vshrl.u32 %v615, 7
    %v617 = vsub.s32 %v402, %v616
    %v618 = vrot.slane %v587, %v617
    %v619 = vlaneseq
    %v620 = vshrl.u32 %v619, 7
    %v621 = vsub.s32 %v402, %v620
    %v622 = vrot.slane %v590, %v621
    %v623 = vsel %vm428, %v598, %v594
    %v624 = vsel %vm429, %v602, %v623
    %v625 = vsel %vm431, %v606, %v624
    %v626 = vsel %vm433, %v610, %v625
    %v627 = vsel %vm435, %v614, %v626
    %v628 = vsel %vm437, %v618, %v627
    %v629 = vsel %vm439, %v622, %v628
    %v631 = vsel %vm476, %v629, -inf
    %632 = vmax.xlane.f32.xlu0 %v631
    %v633 = vpop.xlane.xlu0 %632
    %v635 = vlaneseq
    %v636 = vshrl.u32 %v635, 7
    %v637 = vsub.s32 0, %v636
    %v638 = vrot.slane %v633, %v637
    %v639 = vlaneseq
    %v640 = vshrl.u32 %v639, 7
    %v641 = vsub.s32 1, %v640
    %v642 = vrot.slane %v633, %v641
    %v643 = vlaneseq
    %v644 = vshrl.u32 %v643, 7
    %v645 = vsub.s32 2, %v644
    %v646 = vrot.slane %v633, %v645
    %v647 = vlaneseq
    %v648 = vshrl.u32 %v647, 7
    %v649 = vsub.s32 3, %v648
    %v650 = vrot.slane %v633, %v649
    %v651 = vlaneseq
    %v652 = vshrl.u32 %v651, 7
    %v653 = vsub.s32 4, %v652
    %v654 = vrot.slane %v633, %v653
    %v655 = vlaneseq
    %v656 = vshrl.u32 %v655, 7
    %v657 = vsub.s32 5, %v656
    %v658 = vrot.slane %v633, %v657
    %v659 = vlaneseq
    %v660 = vshrl.u32 %v659, 7
    %v661 = vsub.s32 6, %v660
    %v662 = vrot.slane %v633, %v661
    %v663 = vlaneseq
    %v664 = vshrl.u32 %v663, 7
    %v665 = vsub.s32 7, %v664
    %v666 = vrot.slane %v633, %v665
    %v675 = vsub.f32 %v551, %v638
    %v676 = vsub.f32 %v552, %v642
    %v677 = vsub.f32 %v553, %v646
    %v678 = vsub.f32 %v554, %v650
    %v679 = vsub.f32 %v555, %v654
    %v680 = vsub.f32 %v556, %v658
    %v681 = vsub.f32 %v557, %v662
    %v682 = vsub.f32 %v558, %v666
    %v683 = vmul.f32 %v675, 1.442695
    %v684 = vpow.pop %v683
    %v685 = vmul.f32 %v676, 1.442695
    %v686 = vpow.pop %v685
    %v687 = vmul.f32 %v677, 1.442695
    %v688 = vpow.pop %v687
    %v689 = vmul.f32 %v678, 1.442695
    %v690 = vpow.pop %v689
    %v691 = vmul.f32 %v679, 1.442695
    %v692 = vpow.pop %v691
    %v693 = vmul.f32 %v680, 1.442695
    %v694 = vpow.pop %v693
    %v695 = vmul.f32 %v681, 1.442695
    %v696 = vpow.pop %v695
    %v697 = vmul.f32 %v682, 1.442695
    %v698 = vpow.pop %v697
    %707 = vset.pattern.permute.xlu0 0
    %708 = vperm.xlu0 %707, %v684
    %v709 = vpop.permute.xlu0 %708
    %710 = vset.pattern.permute.xlu0 0
    %711 = vperm.xlu0 %710, %v686
    %v712 = vpop.permute.xlu0 %711
    %713 = vset.pattern.permute.xlu0 0
    %714 = vperm.xlu0 %713, %v688
    %v715 = vpop.permute.xlu0 %714
    %716 = vset.pattern.permute.xlu0 0
    %717 = vperm.xlu0 %716, %v690
    %v718 = vpop.permute.xlu0 %717
    %719 = vset.pattern.permute.xlu0 0
    %720 = vperm.xlu0 %719, %v692
    %v721 = vpop.permute.xlu0 %720
    %722 = vset.pattern.permute.xlu0 0
    %723 = vperm.xlu0 %722, %v694
    %v724 = vpop.permute.xlu0 %723
    %725 = vset.pattern.permute.xlu0 0
    %726 = vperm.xlu0 %725, %v696
    %v727 = vpop.permute.xlu0 %726
    %728 = vset.pattern.permute.xlu0 0
    %729 = vperm.xlu0 %728, %v698
    %v730 = vpop.permute.xlu0 %729
    %v731 = vlaneseq
    %v732 = vshrl.u32 %v731, 7
    %v733 = vsub.s32 %v402, %v732
    %v734 = vrot.slane %v709, %v733
    %v735 = vlaneseq
    %v736 = vshrl.u32 %v735, 7
    %v737 = vsub.s32 %v402, %v736
    %v738 = vrot.slane %v712, %v737
    %v739 = vlaneseq
    %v740 = vshrl.u32 %v739, 7
    %v741 = vsub.s32 %v402, %v740
    %v742 = vrot.slane %v715, %v741
    %v743 = vlaneseq
    %v744 = vshrl.u32 %v743, 7
    %v745 = vsub.s32 %v402, %v744
    %v746 = vrot.slane %v718, %v745
    %v747 = vlaneseq
    %v748 = vshrl.u32 %v747, 7
    %v749 = vsub.s32 %v402, %v748
    %v750 = vrot.slane %v721, %v749
    %v751 = vlaneseq
    %v752 = vshrl.u32 %v751, 7
    %v753 = vsub.s32 %v402, %v752
    %v754 = vrot.slane %v724, %v753
    %v755 = vlaneseq
    %v756 = vshrl.u32 %v755, 7
    %v757 = vsub.s32 %v402, %v756
    %v758 = vrot.slane %v727, %v757
    %v759 = vlaneseq
    %v760 = vshrl.u32 %v759, 7
    %v761 = vsub.s32 %v402, %v760
    %v762 = vrot.slane %v730, %v761
    %v763 = vsel %vm428, %v738, %v734
    %v764 = vsel %vm429, %v742, %v763
    %v765 = vsel %vm431, %v746, %v764
    %v766 = vsel %vm433, %v750, %v765
    %v767 = vsel %vm435, %v754, %v766
    %v768 = vsel %vm437, %v758, %v767
    %v769 = vsel %vm439, %v762, %v768
    %v771 = vsel %vm476, %v769, 0.0
    %772 = vadd.xlane.f32.xlu0 %v771
    %v773 = vpop.xlane.xlu0 %772
    %v774 = vrcp.pop %v773
    %v776 = vlaneseq
    %v777 = vshrl.u32 %v776, 7
    %v778 = vsub.s32 0, %v777
    %v779 = vrot.slane %v774, %v778
    %v780 = vlaneseq
    %v781 = vshrl.u32 %v780, 7
    %v782 = vsub.s32 1, %v781
    %v783 = vrot.slane %v774, %v782
    %v784 = vlaneseq
    %v785 = vshrl.u32 %v784, 7
    %v786 = vsub.s32 2, %v785
    %v787 = vrot.slane %v774, %v786
    %v788 = vlaneseq
    %v789 = vshrl.u32 %v788, 7
    %v790 = vsub.s32 3, %v789
    %v791 = vrot.slane %v774, %v790
    %v792 = vlaneseq
    %v793 = vshrl.u32 %v792, 7
    %v794 = vsub.s32 4, %v793
    %v795 = vrot.slane %v774, %v794
    %v796 = vlaneseq
    %v797 = vshrl.u32 %v796, 7
    %v798 = vsub.s32 5, %v797
    %v799 = vrot.slane %v774, %v798
    %v800 = vlaneseq
    %v801 = vshrl.u32 %v800, 7
    %v802 = vsub.s32 6, %v801
    %v803 = vrot.slane %v774, %v802
    %v804 = vlaneseq
    %v805 = vshrl.u32 %v804, 7
    %v806 = vsub.s32 7, %v805
    %v807 = vrot.slane %v774, %v806
    %v816 = vmul.f32 %v684, %v779
    %v817 = vmul.f32 %v686, %v783
    %v818 = vmul.f32 %v688, %v787
    %v819 = vmul.f32 %v690, %v791
    %v820 = vmul.f32 %v692, %v795
    %v821 = vmul.f32 %v694, %v799
    %v822 = vmul.f32 %v696, %v803
    %v823 = vmul.f32 %v698, %v807
    %832 = vset.pattern.permute.xlu0 0
    %833 = vperm.xlu0 %832, %v816
    %v834 = vpop.permute.xlu0 %833
    %835 = vset.pattern.permute.xlu0 0
    %836 = vperm.xlu0 %835, %v817
    %v837 = vpop.permute.xlu0 %836
    %838 = vset.pattern.permute.xlu0 0
    %839 = vperm.xlu0 %838, %v818
    %v840 = vpop.permute.xlu0 %839
    %841 = vset.pattern.permute.xlu0 0
    %842 = vperm.xlu0 %841, %v819
    %v843 = vpop.permute.xlu0 %842
    %844 = vset.pattern.permute.xlu0 0
    %845 = vperm.xlu0 %844, %v820
    %v846 = vpop.permute.xlu0 %845
    %847 = vset.pattern.permute.xlu0 0
    %848 = vperm.xlu0 %847, %v821
    %v849 = vpop.permute.xlu0 %848
    %850 = vset.pattern.permute.xlu0 0
    %851 = vperm.xlu0 %850, %v822
    %v852 = vpop.permute.xlu0 %851
    %853 = vset.pattern.permute.xlu0 0
    %854 = vperm.xlu0 %853, %v823
    %v855 = vpop.permute.xlu0 %854
    %v856 = vlaneseq
    %v857 = vshrl.u32 %v856, 7
    %v858 = vsub.s32 %v402, %v857
    %v859 = vrot.slane %v834, %v858
    %v860 = vlaneseq
    %v861 = vshrl.u32 %v860, 7
    %v862 = vsub.s32 %v402, %v861
    %v863 = vrot.slane %v837, %v862
    %v864 = vlaneseq
    %v865 = vshrl.u32 %v864, 7
    %v866 = vsub.s32 %v402, %v865
    %v867 = vrot.slane %v840, %v866
    %v868 = vlaneseq
    %v869 = vshrl.u32 %v868, 7
    %v870 = vsub.s32 %v402, %v869
    %v871 = vrot.slane %v843, %v870
    %v872 = vlaneseq
    %v873 = vshrl.u32 %v872, 7
    %v874 = vsub.s32 %v402, %v873
    %v875 = vrot.slane %v846, %v874
    %v876 = vlaneseq
    %v877 = vshrl.u32 %v876, 7
    %v878 = vsub.s32 %v402, %v877
    %v879 = vrot.slane %v849, %v878
    %v880 = vlaneseq
    %v881 = vshrl.u32 %v880, 7
    %v882 = vsub.s32 %v402, %v881
    %v883 = vrot.slane %v852, %v882
    %v884 = vlaneseq
    %v885 = vshrl.u32 %v884, 7
    %v886 = vsub.s32 %v402, %v885
    %v887 = vrot.slane %v855, %v886
    %v888 = vsel %vm428, %v863, %v859
    %v889 = vsel %vm429, %v867, %v888
    %v890 = vsel %vm431, %v871, %v889
    %v891 = vsel %vm433, %v875, %v890
    %v892 = vsel %vm435, %v879, %v891
    %v893 = vsel %vm437, %v883, %v892
    %v894 = vsel %vm439, %v887, %v893
    %v896 = vsel %vm484, 0.0, %v894
    %v898 = vcombine.high %v896, %v896
    %v900 = vunpack.c.l.s4 1966171168
    %v901 = vunpack.c.0.s8 %v900
    %v902 = vlaneseq
    %v903 = vshrl.u32 %v902, 7
    %v904 = vsub.s32 %v901, %v903
    %v905 = vrot.slane %v896, %v904
    %v907 = vunpack.c.l.s4 1966171168
    %v908 = vunpack.c.0.s8 %v907
    %v909 = vlaneseq
    %v910 = vshrl.u32 %v909, 7
    %v911 = vsub.s32 %v908, %v910
    %v912 = vrot.slane %v898, %v911
    %v913 = vcombine.high %v905, %v905
    %v914 = vcombine.high %v912, %v912
    %v916 = vunpack.c.l.s4 1966171168
    %v917 = vunpack.c.0.s8 %v916
    %v918 = vlaneseq
    %v919 = vshrl.u32 %v918, 7
    %v920 = vsub.s32 %v917, %v919
    %v921 = vrot.slane %v905, %v920
    %v923 = vunpack.c.l.s4 1966171168
    %v924 = vunpack.c.0.s8 %v923
    %v925 = vlaneseq
    %v926 = vshrl.u32 %v925, 7
    %v927 = vsub.s32 %v924, %v926
    %v928 = vrot.slane %v912, %v927
    %v930 = vunpack.c.l.s4 1966171168
    %v931 = vunpack.c.0.s8 %v930
    %v932 = vlaneseq
    %v933 = vshrl.u32 %v932, 7
    %v934 = vsub.s32 %v931, %v933
    %v935 = vrot.slane %v913, %v934
    %v937 = vunpack.c.l.s4 1966171168
    %v938 = vunpack.c.0.s8 %v937
    %v939 = vlaneseq
    %v940 = vshrl.u32 %v939, 7
    %v941 = vsub.s32 %v938, %v940
    %v942 = vrot.slane %v914, %v941
    %v943 = vcombine.high %v921, %v921
    %v944 = vcombine.high %v928, %v928
    %v945 = vcombine.high %v935, %v935
    %v946 = vcombine.high %v942, %v942
    %v947 = vsel %vm476, %v921, 0
    %949 = vmatprep.subr.mxu0 0.0
    %950 = vmatpush1.msra.mxu0 %v141
    %951 = vmatprep.subr.mxu0 0.0
    %952 = vmatpush1.msra.mxu0 0.0
    %953 = vmatprep.subr.mxu0 0.0
    %954 = vmatpush1.msra.mxu0 0.0
    %955 = vmatprep.subr.mxu0 0.0
    %956 = vmatpush1.msra.mxu0 0.0
    %957 = vmatprep.subr.mxu0 0.0
    %958 = vmatpush1.msra.mxu0 0.0
    %959 = vmatprep.subr.mxu0 0.0
    %960 = vmatpush1.msra.mxu0 0.0
    %961 = vmatprep.subr.mxu0 0.0
    %962 = vmatpush1.msra.mxu0 0.0
    %963 = vmatprep.subr.mxu0 0.0
    %964 = vmatpush1.msra.mxu0 0.0
    %965 = vmatprep.subr.mxu0 0.0
    %966 = vmatpush1.msra.mxu0 0.0
    %967 = vmatprep.subr.mxu0 0.0
    %968 = vmatpush1.msra.mxu0 0.0
    %969 = vmatprep.subr.mxu0 0.0
    %970 = vmatpush1.msra.mxu0 0.0
    %971 = vmatprep.subr.mxu0 0.0
    %972 = vmatpush1.msra.mxu0 0.0
    %973 = vmatprep.subr.mxu0 0.0
    %974 = vmatpush1.msra.mxu0 0.0
    %975 = vmatprep.subr.mxu0 0.0
    %976 = vmatpush1.msra.mxu0 0.0
    %977 = vmatprep.subr.mxu0 0.0
    %978 = vmatpush1.msra.mxu0 0.0
    %979 = vmatprep.subr.mxu0 0.0
    %980 = vmatpush1.msra.mxu0 0.0
    %981 = vmatprep.subr.mxu0 0.0
    %982 = vmatpush1.msra.mxu0 0.0
    %983 = vmatprep.subr.mxu0 0.0
    %984 = vmatpush1.msra.mxu0 0.0
    %985 = vmatprep.subr.mxu0 0.0
    %986 = vmatpush1.msra.mxu0 0.0
    %987 = vmatprep.subr.mxu0 0.0
    %988 = vmatpush1.msra.mxu0 0.0
    %989 = vmatprep.subr.mxu0 0.0
    %990 = vmatpush1.msra.mxu0 0.0
    %991 = vmatprep.subr.mxu0 0.0
    %992 = vmatpush1.msra.mxu0 0.0
    %993 = vmatprep.subr.mxu0 0.0
    %994 = vmatpush1.msra.mxu0 0.0
    %995 = vmatprep.subr.mxu0 0.0
    %996 = vmatpush1.msra.mxu0 0.0
    %997 = vmatprep.subr.mxu0 0.0
    %998 = vmatpush1.msra.mxu0 0.0
    %999 = vmatprep.subr.mxu0 0.0
    %1000 = vmatpush1.msra.mxu0 0.0
    %1001 = vmatprep.subr.mxu0 0.0
    %1002 = vmatpush1.msra.mxu0 0.0
    %1003 = vmatprep.subr.mxu0 0.0
    %1004 = vmatpush1.msra.mxu0 0.0
    %1005 = vmatprep.subr.mxu0 0.0
    %1006 = vmatpush1.msra.mxu0 0.0
    %1007 = vmatprep.subr.mxu0 0.0
    %1008 = vmatpush1.msra.mxu0 0.0
    %1009 = vmatprep.subr.mxu0 0.0
    %1010 = vmatpush1.msra.mxu0 0.0
    %1011 = vmatprep.subr.mxu0 0.0
    %1012 = vmatpush1.msra.mxu0 0.0
    %1013 = vmatprep.mubr.f32.mxu0 0.0
    %1014 = vmatmul.mubr.f32.gmra.mrb[0].mxu0 %v947
    %v1015 = vpop.f32.mrb[0].mxu0
    %v1016 = vadd.f32 0.0, %v1015
    %v1017 = vpop.f32.mrb[0].mxu0
    %1018 = vdwg.mxu0
    %v1019 = vsel %vm476, %v935, 0
    %1021 = vmatprep.subr.mxu0 0.0
    %1022 = vmatpush1.msra.mxu0 %v142
    %1023 = vmatprep.subr.mxu0 0.0
    %1024 = vmatpush1.msra.mxu0 0.0
    %1025 = vmatprep.subr.mxu0 0.0
    %1026 = vmatpush1.msra.mxu0 0.0
    %1027 = vmatprep.subr.mxu0 0.0
    %1028 = vmatpush1.msra.mxu0 0.0
    %1029 = vmatprep.subr.mxu0 0.0
    %1030 = vmatpush1.msra.mxu0 0.0
    %1031 = vmatprep.subr.mxu0 0.0
    %1032 = vmatpush1.msra.mxu0 0.0
    %1033 = vmatprep.subr.mxu0 0.0
    %1034 = vmatpush1.msra.mxu0 0.0
    %1035 = vmatprep.subr.mxu0 0.0
    %1036 = vmatpush1.msra.mxu0 0.0
    %1037 = vmatprep.subr.mxu0 0.0
    %1038 = vmatpush1.msra.mxu0 0.0
    %1039 = vmatprep.subr.mxu0 0.0
    %1040 = vmatpush1.msra.mxu0 0.0
    %1041 = vmatprep.subr.mxu0 0.0
    %1042 = vmatpush1.msra.mxu0 0.0
    %1043 = vmatprep.subr.mxu0 0.0
    %1044 = vmatpush1.msra.mxu0 0.0
    %1045 = vmatprep.subr.mxu0 0.0
    %1046 = vmatpush1.msra.mxu0 0.0
    %1047 = vmatprep.subr.mxu0 0.0
    %1048 = vmatpush1.msra.mxu0 0.0
    %1049 = vmatprep.subr.mxu0 0.0
    %1050 = vmatpush1.msra.mxu0 0.0
    %1051 = vmatprep.subr.mxu0 0.0
    %1052 = vmatpush1.msra.mxu0 0.0
    %1053 = vmatprep.subr.mxu0 0.0
    %1054 = vmatpush1.msra.mxu0 0.0
    %1055 = vmatprep.subr.mxu0 0.0
    %1056 = vmatpush1.msra.mxu0 0.0
    %1057 = vmatprep.subr.mxu0 0.0
    %1058 = vmatpush1.msra.mxu0 0.0
    %1059 = vmatprep.subr.mxu0 0.0
    %1060 = vmatpush1.msra.mxu0 0.0
    %1061 = vmatprep.subr.mxu0 0.0
    %1062 = vmatpush1.msra.mxu0 0.0
    %1063 = vmatprep.subr.mxu0 0.0
    %1064 = vmatpush1.msra.mxu0 0.0
    %1065 = vmatprep.subr.mxu0 0.0
    %1066 = vmatpush1.msra.mxu0 0.0
    %1067 = vmatprep.subr.mxu0 0.0
    %1068 = vmatpush1.msra.mxu0 0.0
    %1069 = vmatprep.subr.mxu0 0.0
    %1070 = vmatpush1.msra.mxu0 0.0
    %1071 = vmatprep.subr.mxu0 0.0
    %1072 = vmatpush1.msra.mxu0 0.0
    %1073 = vmatprep.subr.mxu0 0.0
    %1074 = vmatpush1.msra.mxu0 0.0
    %1075 = vmatprep.subr.mxu0 0.0
    %1076 = vmatpush1.msra.mxu0 0.0
    %1077 = vmatprep.subr.mxu0 0.0
    %1078 = vmatpush1.msra.mxu0 0.0
    %1079 = vmatprep.subr.mxu0 0.0
    %1080 = vmatpush1.msra.mxu0 0.0
    %1081 = vmatprep.subr.mxu0 0.0
    %1082 = vmatpush1.msra.mxu0 0.0
    %1083 = vmatprep.subr.mxu0 0.0
    %1084 = vmatpush1.msra.mxu0 0.0
    %1085 = vmatprep.mubr.f32.mxu0 0.0
    %1086 = vmatmul.mubr.f32.gmra.mrb[0].mxu0 %v1019
    %v1087 = vpop.f32.mrb[0].mxu0
    %v1088 = vadd.f32 0.0, %v1087
    %v1089 = vpop.f32.mrb[0].mxu0
    %1090 = vdwg.mxu0
    %v1091 = vsel %vm476, %v943, 0
    %1093 = vmatprep.subr.mxu0 0.0
    %1094 = vmatpush1.msra.mxu0 %v143
    %1095 = vmatprep.subr.mxu0 0.0
    %1096 = vmatpush1.msra.mxu0 0.0
    %1097 = vmatprep.subr.mxu0 0.0
    %1098 = vmatpush1.msra.mxu0 0.0
    %1099 = vmatprep.subr.mxu0 0.0
    %1100 = vmatpush1.msra.mxu0 0.0
    %1101 = vmatprep.subr.mxu0 0.0
    %1102 = vmatpush1.msra.mxu0 0.0
    %1103 = vmatprep.subr.mxu0 0.0
    %1104 = vmatpush1.msra.mxu0 0.0
    %1105 = vmatprep.subr.mxu0 0.0
    %1106 = vmatpush1.msra.mxu0 0.0
    %1107 = vmatprep.subr.mxu0 0.0
    %1108 = vmatpush1.msra.mxu0 0.0
    %1109 = vmatprep.subr.mxu0 0.0
    %1110 = vmatpush1.msra.mxu0 0.0
    %1111 = vmatprep.subr.mxu0 0.0
    %1112 = vmatpush1.msra.mxu0 0.0
    %1113 = vmatprep.subr.mxu0 0.0
    %1114 = vmatpush1.msra.mxu0 0.0
    %1115 = vmatprep.subr.mxu0 0.0
    %1116 = vmatpush1.msra.mxu0 0.0
    %1117 = vmatprep.subr.mxu0 0.0
    %1118 = vmatpush1.msra.mxu0 0.0
    %1119 = vmatprep.subr.mxu0 0.0
    %1120 = vmatpush1.msra.mxu0 0.0
    %1121 = vmatprep.subr.mxu0 0.0
    %1122 = vmatpush1.msra.mxu0 0.0
    %1123 = vmatprep.subr.mxu0 0.0
    %1124 = vmatpush1.msra.mxu0 0.0
    %1125 = vmatprep.subr.mxu0 0.0
    %1126 = vmatpush1.msra.mxu0 0.0
    %1127 = vmatprep.subr.mxu0 0.0
    %1128 = vmatpush1.msra.mxu0 0.0
    %1129 = vmatprep.subr.mxu0 0.0
    %1130 = vmatpush1.msra.mxu0 0.0
    %1131 = vmatprep.subr.mxu0 0.0
    %1132 = vmatpush1.msra.mxu0 0.0
    %1133 = vmatprep.subr.mxu0 0.0
    %1134 = vmatpush1.msra.mxu0 0.0
    %1135 = vmatprep.subr.mxu0 0.0
    %1136 = vmatpush1.msra.mxu0 0.0
    %1137 = vmatprep.subr.mxu0 0.0
    %1138 = vmatpush1.msra.mxu0 0.0
    %1139 = vmatprep.subr.mxu0 0.0
    %1140 = vmatpush1.msra.mxu0 0.0
    %1141 = vmatprep.subr.mxu0 0.0
    %1142 = vmatpush1.msra.mxu0 0.0
    %1143 = vmatprep.subr.mxu0 0.0
    %1144 = vmatpush1.msra.mxu0 0.0
    %1145 = vmatprep.subr.mxu0 0.0
    %1146 = vmatpush1.msra.mxu0 0.0
    %1147 = vmatprep.subr.mxu0 0.0
    %1148 = vmatpush1.msra.mxu0 0.0
    %1149 = vmatprep.subr.mxu0 0.0
    %1150 = vmatpush1.msra.mxu0 0.0
    %1151 = vmatprep.subr.mxu0 0.0
    %1152 = vmatpush1.msra.mxu0 0.0
    %1153 = vmatprep.subr.mxu0 0.0
    %1154 = vmatpush1.msra.mxu0 0.0
    %1155 = vmatprep.subr.mxu0 0.0
    %1156 = vmatpush1.msra.mxu0 0.0
    %1157 = vmatprep.mubr.f32.mxu0 0.0
    %1158 = vmatmul.mubr.f32.gmra.mrb[0].mxu0 %v1091
    %v1159 = vpop.f32.mrb[0].mxu0
    %v1160 = vadd.f32 0.0, %v1159
    %v1161 = vpop.f32.mrb[0].mxu0
    %1162 = vdwg.mxu0
    %v1163 = vsel %vm476, %v945, 0
    %1165 = vmatprep.subr.mxu0 0.0
    %1166 = vmatpush1.msra.mxu0 %v144
    %1167 = vmatprep.subr.mxu0 0.0
    %1168 = vmatpush1.msra.mxu0 0.0
    %1169 = vmatprep.subr.mxu0 0.0
    %1170 = vmatpush1.msra.mxu0 0.0
    %1171 = vmatprep.subr.mxu0 0.0
    %1172 = vmatpush1.msra.mxu0 0.0
    %1173 = vmatprep.subr.mxu0 0.0
    %1174 = vmatpush1.msra.mxu0 0.0
    %1175 = vmatprep.subr.mxu0 0.0
    %1176 = vmatpush1.msra.mxu0 0.0
    %1177 = vmatprep.subr.mxu0 0.0
    %1178 = vmatpush1.msra.mxu0 0.0
    %1179 = vmatprep.subr.mxu0 0.0
    %1180 = vmatpush1.msra.mxu0 0.0
    %1181 = vmatprep.subr.mxu0 0.0
    %1182 = vmatpush1.msra.mxu0 0.0
    %1183 = vmatprep.subr.mxu0 0.0
    %1184 = vmatpush1.msra.mxu0 0.0
    %1185 = vmatprep.subr.mxu0 0.0
    %1186 = vmatpush1.msra.mxu0 0.0
    %1187 = vmatprep.subr.mxu0 0.0
    %1188 = vmatpush1.msra.mxu0 0.0
    %1189 = vmatprep.subr.mxu0 0.0
    %1190 = vmatpush1.msra.mxu0 0.0
    %1191 = vmatprep.subr.mxu0 0.0
    %1192 = vmatpush1.msra.mxu0 0.0
    %1193 = vmatprep.subr.mxu0 0.0
    %1194 = vmatpush1.msra.mxu0 0.0
    %1195 = vmatprep.subr.mxu0 0.0
    %1196 = vmatpush1.msra.mxu0 0.0
    %1197 = vmatprep.subr.mxu0 0.0
    %1198 = vmatpush1.msra.mxu0 0.0
    %1199 = vmatprep.subr.mxu0 0.0
    %1200 = vmatpush1.msra.mxu0 0.0
    %1201 = vmatprep.subr.mxu0 0.0
    %1202 = vmatpush1.msra.mxu0 0.0
    %1203 = vmatprep.subr.mxu0 0.0
    %1204 = vmatpush1.msra.mxu0 0.0
    %1205 = vmatprep.subr.mxu0 0.0
    %1206 = vmatpush1.msra.mxu0 0.0
    %1207 = vmatprep.subr.mxu0 0.0
    %1208 = vmatpush1.msra.mxu0 0.0
    %1209 = vmatprep.subr.mxu0 0.0
    %1210 = vmatpush1.msra.mxu0 0.0
    %1211 = vmatprep.subr.mxu0 0.0
    %1212 = vmatpush1.msra.mxu0 0.0
    %1213 = vmatprep.subr.mxu0 0.0
    %1214 = vmatpush1.msra.mxu0 0.0
    %1215 = vmatprep.subr.mxu0 0.0
    %1216 = vmatpush1.msra.mxu0 0.0
    %1217 = vmatprep.subr.mxu0 0.0
    %1218 = vmatpush1.msra.mxu0 0.0
    %1219 = vmatprep.subr.mxu0 0.0
    %1220 = vmatpush1.msra.mxu0 0.0
    %1221 = vmatprep.subr.mxu0 0.0
    %1222 = vmatpush1.msra.mxu0 0.0
    %1223 = vmatprep.subr.mxu0 0.0
    %1224 = vmatpush1.msra.mxu0 0.0
    %1225 = vmatprep.subr.mxu0 0.0
    %1226 = vmatpush1.msra.mxu0 0.0
    %1227 = vmatprep.subr.mxu0 0.0
    %1228 = vmatpush1.msra.mxu0 0.0
    %1229 = vmatprep.mubr.f32.mxu0 0.0
    %1230 = vmatmul.mubr.f32.gmra.mrb[0].mxu0 %v1163
    %v1231 = vpop.f32.mrb[0].mxu0
    %v1232 = vadd.f32 0.0, %v1231
    %v1233 = vpop.f32.mrb[0].mxu0
    %1234 = vdwg.mxu0
    %v1235 = vsel %vm476, %v928, 0
    %1237 = vmatprep.subr.mxu0 0.0
    %1238 = vmatpush1.msra.mxu0 %v145
    %1239 = vmatprep.subr.mxu0 0.0
    %1240 = vmatpush1.msra.mxu0 0.0
    %1241 = vmatprep.subr.mxu0 0.0
    %1242 = vmatpush1.msra.mxu0 0.0
    %1243 = vmatprep.subr.mxu0 0.0
    %1244 = vmatpush1.msra.mxu0 0.0
    %1245 = vmatprep.subr.mxu0 0.0
    %1246 = vmatpush1.msra.mxu0 0.0
    %1247 = vmatprep.subr.mxu0 0.0
    %1248 = vmatpush1.msra.mxu0 0.0
    %1249 = vmatprep.subr.mxu0 0.0
    %1250 = vmatpush1.msra.mxu0 0.0
    %1251 = vmatprep.subr.mxu0 0.0
    %1252 = vmatpush1.msra.mxu0 0.0
    %1253 = vmatprep.subr.mxu0 0.0
    %1254 = vmatpush1.msra.mxu0 0.0
    %1255 = vmatprep.subr.mxu0 0.0
    %1256 = vmatpush1.msra.mxu0 0.0
    %1257 = vmatprep.subr.mxu0 0.0
    %1258 = vmatpush1.msra.mxu0 0.0
    %1259 = vmatprep.subr.mxu0 0.0
    %1260 = vmatpush1.msra.mxu0 0.0
    %1261 = vmatprep.subr.mxu0 0.0
    %1262 = vmatpush1.msra.mxu0 0.0
    %1263 = vmatprep.subr.mxu0 0.0
    %1264 = vmatpush1.msra.mxu0 0.0
    %1265 = vmatprep.subr.mxu0 0.0
    %1266 = vmatpush1.msra.mxu0 0.0
    %1267 = vmatprep.subr.mxu0 0.0
    %1268 = vmatpush1.msra.mxu0 0.0
    %1269 = vmatprep.subr.mxu0 0.0
    %1270 = vmatpush1.msra.mxu0 0.0
    %1271 = vmatprep.subr.mxu0 0.0
    %1272 = vmatpush1.msra.mxu0 0.0
    %1273 = vmatprep.subr.mxu0 0.0
    %1274 = vmatpush1.msra.mxu0 0.0
    %1275 = vmatprep.subr.mxu0 0.0
    %1276 = vmatpush1.msra.mxu0 0.0
    %1277 = vmatprep.subr.mxu0 0.0
    %1278 = vmatpush1.msra.mxu0 0.0
    %1279 = vmatprep.subr.mxu0 0.0
    %1280 = vmatpush1.msra.mxu0 0.0
    %1281 = vmatprep.subr.mxu0 0.0
    %1282 = vmatpush1.msra.mxu0 0.0
    %1283 = vmatprep.subr.mxu0 0.0
    %1284 = vmatpush1.msra.mxu0 0.0
    %1285 = vmatprep.subr.mxu0 0.0
    %1286 = vmatpush1.msra.mxu0 0.0
    %1287 = vmatprep.subr.mxu0 0.0
    %1288 = vmatpush1.msra.mxu0 0.0
    %1289 = vmatprep.subr.mxu0 0.0
    %1290 = vmatpush1.msra.mxu0 0.0
    %1291 = vmatprep.subr.mxu0 0.0
    %1292 = vmatpush1.msra.mxu0 0.0
    %1293 = vmatprep.subr.mxu0 0.0
    %1294 = vmatpush1.msra.mxu0 0.0
    %1295 = vmatprep.subr.mxu0 0.0
    %1296 = vmatpush1.msra.mxu0 0.0
    %1297 = vmatprep.subr.mxu0 0.0
    %1298 = vmatpush1.msra.mxu0 0.0
    %1299 = vmatprep.subr.mxu0 0.0
    %1300 = vmatpush1.msra.mxu0 0.0
    %1301 = vmatprep.mubr.f32.mxu0 0.0
    %1302 = vmatmul.mubr.f32.gmra.mrb[0].mxu0 %v1235
    %v1303 = vpop.f32.mrb[0].mxu0
    %v1304 = vadd.f32 0.0, %v1303
    %v1305 = vpop.f32.mrb[0].mxu0
    %1306 = vdwg.mxu0
    %v1307 = vsel %vm476, %v942, 0
    %1309 = vmatprep.subr.mxu0 0.0
    %1310 = vmatpush1.msra.mxu0 %v146
    %1311 = vmatprep.subr.mxu0 0.0
    %1312 = vmatpush1.msra.mxu0 0.0
    %1313 = vmatprep.subr.mxu0 0.0
    %1314 = vmatpush1.msra.mxu0 0.0
    %1315 = vmatprep.subr.mxu0 0.0
    %1316 = vmatpush1.msra.mxu0 0.0
    %1317 = vmatprep.subr.mxu0 0.0
    %1318 = vmatpush1.msra.mxu0 0.0
    %1319 = vmatprep.subr.mxu0 0.0
    %1320 = vmatpush1.msra.mxu0 0.0
    %1321 = vmatprep.subr.mxu0 0.0
    %1322 = vmatpush1.msra.mxu0 0.0
    %1323 = vmatprep.subr.mxu0 0.0
    %1324 = vmatpush1.msra.mxu0 0.0
    %1325 = vmatprep.subr.mxu0 0.0
    %1326 = vmatpush1.msra.mxu0 0.0
    %1327 = vmatprep.subr.mxu0 0.0
    %1328 = vmatpush1.msra.mxu0 0.0
    %1329 = vmatprep.subr.mxu0 0.0
    %1330 = vmatpush1.msra.mxu0 0.0
    %1331 = vmatprep.subr.mxu0 0.0
    %1332 = vmatpush1.msra.mxu0 0.0
    %1333 = vmatprep.subr.mxu0 0.0
    %1334 = vmatpush1.msra.mxu0 0.0
    %1335 = vmatprep.subr.mxu0 0.0
    %1336 = vmatpush1.msra.mxu0 0.0
    %1337 = vmatprep.subr.mxu0 0.0
    %1338 = vmatpush1.msra.mxu0 0.0
    %1339 = vmatprep.subr.mxu0 0.0
    %1340 = vmatpush1.msra.mxu0 0.0
    %1341 = vmatprep.subr.mxu0 0.0
    %1342 = vmatpush1.msra.mxu0 0.0
    %1343 = vmatprep.subr.mxu0 0.0
    %1344 = vmatpush1.msra.mxu0 0.0
    %1345 = vmatprep.subr.mxu0 0.0
    %1346 = vmatpush1.msra.mxu0 0.0
    %1347 = vmatprep.subr.mxu0 0.0
    %1348 = vmatpush1.msra.mxu0 0.0
    %1349 = vmatprep.subr.mxu0 0.0
    %1350 = vmatpush1.msra.mxu0 0.0
    %1351 = vmatprep.subr.mxu0 0.0
    %1352 = vmatpush1.msra.mxu0 0.0
    %1353 = vmatprep.subr.mxu0 0.0
    %1354 = vmatpush1.msra.mxu0 0.0
    %1355 = vmatprep.subr.mxu0 0.0
    %1356 = vmatpush1.msra.mxu0 0.0
    %1357 = vmatprep.subr.mxu0 0.0
    %1358 = vmatpush1.msra.mxu0 0.0
    %1359 = vmatprep.subr.mxu0 0.0
    %1360 = vmatpush1.msra.mxu0 0.0
    %1361 = vmatprep.subr.mxu0 0.0
    %1362 = vmatpush1.msra.mxu0 0.0
    %1363 = vmatprep.subr.mxu0 0.0
    %1364 = vmatpush1.msra.mxu0 0.0
    %1365 = vmatprep.subr.mxu0 0.0
    %1366 = vmatpush1.msra.mxu0 0.0
    %1367 = vmatprep.subr.mxu0 0.0
    %1368 = vmatpush1.msra.mxu0 0.0
    %1369 = vmatprep.subr.mxu0 0.0
    %1370 = vmatpush1.msra.mxu0 0.0
    %1371 = vmatprep.subr.mxu0 0.0
    %1372 = vmatpush1.msra.mxu0 0.0
    %1373 = vmatprep.mubr.f32.mxu0 0.0
    %1374 = vmatmul.mubr.f32.gmra.mrb[0].mxu0 %v1307
    %v1375 = vpop.f32.mrb[0].mxu0
    %v1376 = vadd.f32 0.0, %v1375
    %v1377 = vpop.f32.mrb[0].mxu0
    %1378 = vdwg.mxu0
    %v1379 = vsel %vm476, %v944, 0
    %1381 = vmatprep.subr.mxu0 0.0
    %1382 = vmatpush1.msra.mxu0 %v147
    %1383 = vmatprep.subr.mxu0 0.0
    %1384 = vmatpush1.msra.mxu0 0.0
    %1385 = vmatprep.subr.mxu0 0.0
    %1386 = vmatpush1.msra.mxu0 0.0
    %1387 = vmatprep.subr.mxu0 0.0
    %1388 = vmatpush1.msra.mxu0 0.0
    %1389 = vmatprep.subr.mxu0 0.0
    %1390 = vmatpush1.msra.mxu0 0.0
    %1391 = vmatprep.subr.mxu0 0.0
    %1392 = vmatpush1.msra.mxu0 0.0
    %1393 = vmatprep.subr.mxu0 0.0
    %1394 = vmatpush1.msra.mxu0 0.0
    %1395 = vmatprep.subr.mxu0 0.0
    %1396 = vmatpush1.msra.mxu0 0.0
    %1397 = vmatprep.subr.mxu0 0.0
    %1398 = vmatpush1.msra.mxu0 0.0
    %1399 = vmatprep.subr.mxu0 0.0
    %1400 = vmatpush1.msra.mxu0 0.0
    %1401 = vmatprep.subr.mxu0 0.0
    %1402 = vmatpush1.msra.mxu0 0.0
    %1403 = vmatprep.subr.mxu0 0.0
    %1404 = vmatpush1.msra.mxu0 0.0
    %1405 = vmatprep.subr.mxu0 0.0
    %1406 = vmatpush1.msra.mxu0 0.0
    %1407 = vmatprep.subr.mxu0 0.0
    %1408 = vmatpush1.msra.mxu0 0.0
    %1409 = vmatprep.subr.mxu0 0.0
    %1410 = vmatpush1.msra.mxu0 0.0
    %1411 = vmatprep.subr.mxu0 0.0
    %1412 = vmatpush1.msra.mxu0 0.0
    %1413 = vmatprep.subr.mxu0 0.0
    %1414 = vmatpush1.msra.mxu0 0.0
    %1415 = vmatprep.subr.mxu0 0.0
    %1416 = vmatpush1.msra.mxu0 0.0
    %1417 = vmatprep.subr.mxu0 0.0
    %1418 = vmatpush1.msra.mxu0 0.0
    %1419 = vmatprep.subr.mxu0 0.0
    %1420 = vmatpush1.msra.mxu0 0.0
    %1421 = vmatprep.subr.mxu0 0.0
    %1422 = vmatpush1.msra.mxu0 0.0
    %1423 = vmatprep.subr.mxu0 0.0
    %1424 = vmatpush1.msra.mxu0 0.0
    %1425 = vmatprep.subr.mxu0 0.0
    %1426 = vmatpush1.msra.mxu0 0.0
    %1427 = vmatprep.subr.mxu0 0.0
    %1428 = vmatpush1.msra.mxu0 0.0
    %1429 = vmatprep.subr.mxu0 0.0
    %1430 = vmatpush1.msra.mxu0 0.0
    %1431 = vmatprep.subr.mxu0 0.0
    %1432 = vmatpush1.msra.mxu0 0.0
    %1433 = vmatprep.subr.mxu0 0.0
    %1434 = vmatpush1.msra.mxu0 0.0
    %1435 = vmatprep.subr.mxu0 0.0
    %1436 = vmatpush1.msra.mxu0 0.0
    %1437 = vmatprep.subr.mxu0 0.0
    %1438 = vmatpush1.msra.mxu0 0.0
    %1439 = vmatprep.subr.mxu0 0.0
    %1440 = vmatpush1.msra.mxu0 0.0
    %1441 = vmatprep.subr.mxu0 0.0
    %1442 = vmatpush1.msra.mxu0 0.0
    %1443 = vmatprep.subr.mxu0 0.0
    %1444 = vmatpush1.msra.mxu0 0.0
    %1445 = vmatprep.mubr.f32.mxu0 0.0
    %1446 = vmatmul.mubr.f32.gmra.mrb[0].mxu0 %v1379
    %v1447 = vpop.f32.mrb[0].mxu0
    %v1448 = vadd.f32 0.0, %v1447
    %v1449 = vpop.f32.mrb[0].mxu0
    %1450 = vdwg.mxu0
    %v1451 = vsel %vm476, %v946, 0
    %1453 = vmatprep.subr.mxu0 0.0
    %1454 = vmatpush1.msra.mxu0 %v148
    %1455 = vmatprep.subr.mxu0 0.0
    %1456 = vmatpush1.msra.mxu0 0.0
    %1457 = vmatprep.subr.mxu0 0.0
    %1458 = vmatpush1.msra.mxu0 0.0
    %1459 = vmatprep.subr.mxu0 0.0
    %1460 = vmatpush1.msra.mxu0 0.0
    %1461 = vmatprep.subr.mxu0 0.0
    %1462 = vmatpush1.msra.mxu0 0.0
    %1463 = vmatprep.subr.mxu0 0.0
    %1464 = vmatpush1.msra.mxu0 0.0
    %1465 = vmatprep.subr.mxu0 0.0
    %1466 = vmatpush1.msra.mxu0 0.0
    %1467 = vmatprep.subr.mxu0 0.0
    %1468 = vmatpush1.msra.mxu0 0.0
    %1469 = vmatprep.subr.mxu0 0.0
    %1470 = vmatpush1.msra.mxu0 0.0
    %1471 = vmatprep.subr.mxu0 0.0
    %1472 = vmatpush1.msra.mxu0 0.0
    %1473 = vmatprep.subr.mxu0 0.0
    %1474 = vmatpush1.msra.mxu0 0.0
    %1475 = vmatprep.subr.mxu0 0.0
    %1476 = vmatpush1.msra.mxu0 0.0
    %1477 = vmatprep.subr.mxu0 0.0
    %1478 = vmatpush1.msra.mxu0 0.0
    %1479 = vmatprep.subr.mxu0 0.0
    %1480 = vmatpush1.msra.mxu0 0.0
    %1481 = vmatprep.subr.mxu0 0.0
    %1482 = vmatpush1.msra.mxu0 0.0
    %1483 = vmatprep.subr.mxu0 0.0
    %1484 = vmatpush1.msra.mxu0 0.0
    %1485 = vmatprep.subr.mxu0 0.0
    %1486 = vmatpush1.msra.mxu0 0.0
    %1487 = vmatprep.subr.mxu0 0.0
    %1488 = vmatpush1.msra.mxu0 0.0
    %1489 = vmatprep.subr.mxu0 0.0
    %1490 = vmatpush1.msra.mxu0 0.0
    %1491 = vmatprep.subr.mxu0 0.0
    %1492 = vmatpush1.msra.mxu0 0.0
    %1493 = vmatprep.subr.mxu0 0.0
    %1494 = vmatpush1.msra.mxu0 0.0
    %1495 = vmatprep.subr.mxu0 0.0
    %1496 = vmatpush1.msra.mxu0 0.0
    %1497 = vmatprep.subr.mxu0 0.0
    %1498 = vmatpush1.msra.mxu0 0.0
    %1499 = vmatprep.subr.mxu0 0.0
    %1500 = vmatpush1.msra.mxu0 0.0
    %1501 = vmatprep.subr.mxu0 0.0
    %1502 = vmatpush1.msra.mxu0 0.0
    %1503 = vmatprep.subr.mxu0 0.0
    %1504 = vmatpush1.msra.mxu0 0.0
    %1505 = vmatprep.subr.mxu0 0.0
    %1506 = vmatpush1.msra.mxu0 0.0
    %1507 = vmatprep.subr.mxu0 0.0
    %1508 = vmatpush1.msra.mxu0 0.0
    %1509 = vmatprep.subr.mxu0 0.0
    %1510 = vmatpush1.msra.mxu0 0.0
    %1511 = vmatprep.subr.mxu0 0.0
    %1512 = vmatpush1.msra.mxu0 0.0
    %1513 = vmatprep.subr.mxu0 0.0
    %1514 = vmatpush1.msra.mxu0 0.0
    %1515 = vmatprep.subr.mxu0 0.0
    %1516 = vmatpush1.msra.mxu0 0.0
    %1517 = vmatprep.mubr.f32.mxu0 0.0
    %1518 = vmatmul.mubr.f32.gmra.mrb[0].mxu0 %v1451
    %v1519 = vpop.f32.mrb[0].mxu0
    %v1520 = vadd.f32 0.0, %v1519
    %v1521 = vpop.f32.mrb[0].mxu0
    %1522 = vdwg.mxu0
    %1523 = vst.msk [vmem:[#allocation7] sm:$0xff] %vm476, %v896
    %v1532 = vrot.slane %v1088, 7
    %v1533 = vsel %vm428, %v1532, %v1016
    %v1534 = vrot.slane %v1160, 6
    %v1535 = vsel %vm429, %v1534, %v1533
    %v1536 = vrot.slane %v1232, 5
    %v1537 = vsel %vm431, %v1536, %v1535
    %v1538 = vrot.slane %v1304, 4
    %v1539 = vsel %vm433, %v1538, %v1537
    %v1540 = vrot.slane %v1376, 3
    %v1541 = vsel %vm435, %v1540, %v1539
    %v1542 = vrot.slane %v1448, 2
    %v1543 = vsel %vm437, %v1542, %v1541
    %v1544 = vrot.slane %v1520, 1
    %v1545 = vsel %vm439, %v1544, %v1543
    %1547 = vst.msk [vmem:[#allocation8] sm:$0xff] %vm149, %v1545
    %1548 = vst.msk [vmem:[#allocation10] sm:$0xff] %vm476, %v629
    // Predicated region
    $region34: #{tpu_custom_call.1} parent=1 // pred_check
      _
    $region35: #{tpu_custom_call.1} parent=1 // pred_check_branch
      %1550 = sbr.rel (0) target = $region37
    $region36: #{tpu_custom_call.1} parent=1 // pred_region
      %s1552 = ssub.s32 128, 128
      %1553 = vsyncadd [#allocation4], %s1552
      %s1555 = sshll.u32 [#allocation7], 4
      %s1556 = int_to_ptr.vmem [resolvable:$true] %s1555
      %1558 = dma.vmem_to_hbm [thread:$0]  %s1556, 128, %s6, [#allocation4]
    $region37: #{tpu_custom_call.1} parent=1 // pred_fallthru
      _
    // Predicated region
    $region38: #{tpu_custom_call.1} parent=1 // pred_check
      _
    $region39: #{tpu_custom_call.1} parent=1 // pred_check_branch
      %1560 = sbr.rel (0) target = $region41
    $region40: #{tpu_custom_call.1} parent=1 // pred_region
      %s1562 = ssub.s32 128, 128
      %1563 = vsyncadd [#allocation9], %s1562
      %s1565 = sshll.u32 [#allocation8], 4
      %s1566 = int_to_ptr.vmem [resolvable:$true] %s1565
      %1568 = dma.vmem_to_hbm [thread:$0]  %s1566, 128, %s7, [#allocation9]
    $region41: #{tpu_custom_call.1} parent=1 // pred_fallthru
      _
    // Predicated region
    $region42: #{tpu_custom_call.1} parent=1 // pred_check
      _
    $region43: #{tpu_custom_call.1} parent=1 // pred_check_branch
      %1570 = sbr.rel (0) target = $region45
    $region44: #{tpu_custom_call.1} parent=1 // pred_region
      %s1572 = ssub.s32 128, 128
      %1573 = vsyncadd [#allocation9], %s1572
      %s1575 = sshll.u32 [#allocation10], 4
      %s1576 = int_to_ptr.vmem [resolvable:$true] %s1575
      %1578 = dma.vmem_to_hbm [thread:$0]  %s1576, 128, %s8, [#allocation9]
    $region45: #{tpu_custom_call.1} parent=1 // pred_fallthru
      _
    // Predicated region
    $region46: #{tpu_custom_call.1} parent=1 // pred_check
      _
    $region47: #{tpu_custom_call.1} parent=1 // pred_check_branch
      %1580 = sbr.rel (0) target = $region49
    $region48: #{tpu_custom_call.1} parent=1 // pred_region
      %1581 = dma.done [#allocation4], 128
    $region49: #{tpu_custom_call.1} parent=1 // pred_fallthru
      _
    // Predicated region
    $region50: #{tpu_custom_call.1} parent=1 // pred_check
      _
    $region51: #{tpu_custom_call.1} parent=1 // pred_check_branch
      %1583 = sbr.rel (0) target = $region53
    $region52: #{tpu_custom_call.1} parent=1 // pred_region
      %1584 = dma.done [#allocation9], 128
    $region53: #{tpu_custom_call.1} parent=1 // pred_fallthru
      _
    // Predicated region
    $region54: #{tpu_custom_call.1} parent=1 // pred_check
      _
    $region55: #{tpu_custom_call.1} parent=1 // pred_check_branch
      %1586 = sbr.rel (0) target = $region57
    $region56: #{tpu_custom_call.1} parent=1 // pred_region
      %1587 = dma.done [#allocation9], 128
    $region57: #{tpu_custom_call.1} parent=1 // pred_fallthru
      _
    %1588 = vsyncpa [#allocation3], 1
    %1589 = vsyncpa [#allocation6], 1
    %1590 = vsyncpa [#allocation4], 1
    %1591 = vsyncpa [#allocation9], 1

</llo_original>
